<compile_context>
chip_gen: v7x
topology: tpu7x:2x2x1
jax: 0.10.0
libtpu: 0.0.40
codegen_flags: <defaults>
</compile_context>

<pallas_src>
import functools

import jax
import jax.numpy as jnp
from jax.experimental import pallas as pl
from jax.experimental.pallas import tpu as pltpu

_MIB = 1024 * 1024


# ---------------------------------------------------------------------------
# Kernel: one grid step == (one row block of expert-grouped tokens) x (one
# hidden-dim tile of that block's expert weights).
# ---------------------------------------------------------------------------
def _moe_grouped_kernel(block_expert_ref, block_active_ref,
                        x_ref, w1_ref, w3_ref, w2_ref, comb_ref, out_ref):
    """
    block_expert_ref : SMEM (NB,)  expert id owning row block i
    block_active_ref : SMEM (NB,)  1 if row block i has any routed token
    x_ref    : (tT, D)      gathered token rows (grouped by expert)
    w1_ref   : (1, D, tH)   w1 tile of this block's expert
    w3_ref   : (1, D, tH)   w3 tile of this block's expert
    w2_ref   : (1, tH, D)   w2 tile of this block's expert
    comb_ref : (tT, 1) f32  per-row combine weight (0 for padding rows)
    out_ref  : (tT, D) f32  per-row expert output (acts as the H accumulator)
    """
    i = pl.program_id(0)
    h = pl.program_id(1)
    n_h = pl.num_programs(1)

    @pl.when(h == 0)
    def _init():
        out_ref[...] = jnp.zeros_like(out_ref)

    # Skip all MXU work for (trailing) row blocks that received no tokens.
    @pl.when(block_active_ref[i] > 0)
    def _compute():
        x = x_ref[...]
        h1 = jnp.dot(x, w1_ref[0], preferred_element_type=jnp.float32)
        h3 = jnp.dot(x, w3_ref[0], preferred_element_type=jnp.float32)
        act = (h1 * jax.nn.sigmoid(h1)) * h3              # SwiGLU in f32
        out_ref[...] += jnp.dot(act.astype(x.dtype), w2_ref[0],
                                preferred_element_type=jnp.float32)

    @pl.when(h == n_h - 1)
    def _finalize():
        out_ref[...] = comb_ref[...] * out_ref[...]       # scale by routing wt


# ---------------------------------------------------------------------------
# Tile / VMEM sizing helpers (generation aware).
# ---------------------------------------------------------------------------
def _physical_vmem_bytes():
    try:
        return int(pltpu.get_tpu_info().vmem_capacity_bytes)
    except Exception:                    # conservative (v7x-sized) fallback
        return 64 * _MIB


def _vmem_requirement(tT, tH, D, dtype_bytes, weight_buffers):
    x_buf = 2 * tT * D * dtype_bytes                     # double-buffered rows
    w_buf = weight_buffers * 3 * D * tH * dtype_bytes    # w1 + w3 + w2 tiles
    comb_buf = 2 * tT * 4
    out_buf = 2 * tT * D * 4                             # f32 output/accum
    return x_buf + w_buf + comb_buf + out_buf


def _pick_hidden_block(H, tT, D, dtype_bytes, budget):
    """Largest 128-lane-aligned divisor of H whose tiles fit `budget`."""
    cands = [H // k for k in range(1, H // 128 + 1)
             if H % k == 0 and (H // k) % 128 == 0]
    for tH in cands:                                     # descending in tH
        if _vmem_requirement(tT, tH, D, dtype_bytes, 2) <= budget:
            return tH
    return cands[-1] if cands else H


def _weight_spec(block_shape, index_map, buffers):
    if buffers > 2:
        try:
            return pl.BlockSpec(block_shape, index_map,
                                pipeline_mode=pl.Buffered(buffers))
        except Exception:                # older jax without pipeline_mode
            pass
    return pl.BlockSpec(block_shape, index_map)


# ---------------------------------------------------------------------------
# Forward
# ---------------------------------------------------------------------------
@functools.partial(
    jax.jit,
    static_argnames=("num_experts_per_tok", "token_block", "hidden_block",
                     "weight_buffer_count"))
def moe_layer_forward(inputs, gate_w, w1_all, w3_all, w2_all, *,
                      num_experts_per_tok, token_block=256, hidden_block=None,
                      weight_buffer_count=None):
    """Reproduces MoeLayer.forward (group=None, all experts present).

    inputs : (T, D)       gate_w : (E, D)        (logits = inputs @ gate_w.T)
    w1_all : (E, D, H)    w3_all : (E, D, H)     (already transposed like w.T)
    w2_all : (E, H, D)
    """
    T, D = inputs.shape
    E, _, H = w1_all.shape
    K = num_experts_per_tok
    N = T * K
    dtype_bytes = jnp.dtype(inputs.dtype).itemsize

    tT = token_block
    assert tT % 8 == 0, "token_block must be a multiple of 8"

    # ---- generation-aware VMEM budget & hidden-dim tile ----------------------
    vmem_phys = _physical_vmem_bytes()          # 64 MiB v7x, 128 MiB v5e/v6e
    budget = int(vmem_phys * 0.75)              # ~48 MiB v7x, ~96 MiB v5e/v6e
    tH = (_pick_hidden_block(H, tT, D, dtype_bytes, budget)
          if hidden_block is None else hidden_block)
    assert H % tH == 0, "hidden_block must divide H"
    assert tH % 128 == 0, "hidden_block must be a multiple of 128 lanes"
    n_h = H // tH

    # Triple-buffer weight DMAs only when H is tiled and VMEM allows (v5e/v6e).
    if weight_buffer_count is None:
        weight_buffer_count = 2
        if (n_h > 1 and vmem_phys >= 100 * _MIB and
                _vmem_requirement(tT, tH, D, dtype_bytes, 3) <= budget):
            weight_buffer_count = 3

    req = _vmem_requirement(tT, tH, D, dtype_bytes, weight_buffer_count)
    vmem_limit = req + max(req // 4, 4 * _MIB)      # requirement + headroom
    vmem_limit = max(vmem_limit, 32 * _MIB)
    vmem_limit = min(vmem_limit, int(vmem_phys * 0.80))
    vmem_limit = int(max(vmem_limit, req))          # never clamp below need

    # ---- gate / routing (tiny, plain JAX glue) -------------------------------
    gate_logits = inputs @ gate_w.T                                   # (T, E)
    weights, selected = jax.lax.top_k(gate_logits, K)
    weights = jax.nn.softmax(weights.astype(jnp.float32), axis=1)     # keep f32

    # ---- sort assignments by expert -> grouped, block-padded layout ----------
    flat_expert = selected.reshape(-1).astype(jnp.int32)              # (N,)
    flat_token = jnp.repeat(jnp.arange(T, dtype=jnp.int32), K)        # (N,)
    flat_weight = weights.reshape(-1)                                 # (N,) f32
    order = jnp.argsort(flat_expert)
    sorted_token = flat_token[order]
    sorted_weight = flat_weight[order]

    counts = jnp.bincount(flat_expert, length=E).astype(jnp.int32)    # (E,)
    group_start = jnp.cumsum(counts) - counts
    padded_counts = ((counts + tT - 1) // tT) * tT
    pad_end = jnp.cumsum(padded_counts)
    pad_start = pad_end - padded_counts
    total_padded = pad_end[-1]

    NB = pl.cdiv(N, tT) + E          # static worst-case number of row blocks
    NP = NB * tT

    r = jnp.arange(NP, dtype=jnp.int32)
    e_of_row = jnp.searchsorted(pad_end, r, side="right")
    e_clip = jnp.minimum(e_of_row, E - 1).astype(jnp.int32)
    p = r - pad_start[e_clip]
    valid = (r < total_padded) & (p < counts[e_clip])
    src = jnp.clip(group_start[e_clip] + p, 0, N - 1)

    gather_token = jnp.where(valid, sorted_token[src], 0)             # (NP,)
    comb = jnp.where(valid, sorted_weight[src], 0.0)[:, None]         # (NP,1) f32

    # TODO(synk): token-row gather/scatter stays in XLA; kernel-side DMA gather
    # driven by scalar-prefetched row ids would save ~2*NP*D HBM bytes.
    x_gathered = inputs[gather_token]                                 # (NP, D)

    block_expert_raw = e_clip[::tT]                                   # (NB,)
    block_active = valid.reshape(NB, tT).any(axis=1).astype(jnp.int32)
    # Trailing all-padding blocks inherit the previous block's expert id so
    # their (skipped) weight block index never changes -> no wasted weight DMA.
    nb_active = total_padded // tT
    last_expert = block_expert_raw[jnp.maximum(nb_active - 1, 0)]
    block_expert = jnp.where(jnp.arange(NB, dtype=jnp.int32) < nb_active,
                             block_expert_raw, last_expert).astype(jnp.int32)

    # ---- cost hint ------------------------------------------------------------
    flops = 6 * NP * D * H
    bytes_accessed = (dtype_bytes * (3 * E * D * H + NP * D)
                      + 4 * (NP * D + NP))

    w13_spec = _weight_spec((1, D, tH), lambda i, h, be, ba: (be[i], 0, h),
                            weight_buffer_count)
    w2_spec = _weight_spec((1, tH, D), lambda i, h, be, ba: (be[i], h, 0),
                           weight_buffer_count)

    # ---- grouped expert SwiGLU MLPs (Pallas hot path) -------------------------
    y = pl.pallas_call(
        _moe_grouped_kernel,
        out_shape=jax.ShapeDtypeStruct((NP, D), jnp.float32),
        grid_spec=pltpu.PrefetchScalarGridSpec(
            num_scalar_prefetch=2,
            grid=(NB, n_h),
            in_specs=[
                pl.BlockSpec((tT, D), lambda i, h, be, ba: (i, 0)),   # token rows
                w13_spec,                                             # w1[e]
                w13_spec,                                             # w3[e]
                w2_spec,                                              # w2[e]
                pl.BlockSpec((tT, 1), lambda i, h, be, ba: (i, 0)),   # combine wts
            ],
            out_specs=pl.BlockSpec((tT, D), lambda i, h, be, ba: (i, 0)),
        ),
        compiler_params=pltpu.CompilerParams(
            dimension_semantics=("parallel", "arbitrary"),
            vmem_limit_bytes=vmem_limit,
        ),
        cost_estimate=pl.CostEstimate(
            flops=int(flops),
            transcendentals=int(NP * H),
            bytes_accessed=int(bytes_accessed),
        ),
    )(block_expert, block_active, x_gathered, w1_all, w3_all, w2_all, comb)

    # ---- scatter routed-row outputs back to tokens (f32 accumulation) --------
    out = jnp.zeros((T, D), jnp.float32).at[gather_token].add(y)
    # TODO(synk): distributed all_reduce over `group` intentionally omitted (group=None).
    # TODO(synk): torch module skips experts missing from the weight dict; all experts assumed present.
    return out.astype(inputs.dtype)


def _reference_forward(inputs, gate_w, w1_all, w3_all, w2_all, num_experts_per_tok):
    """Pure-JAX reference mirroring the torch module semantics."""
    gate_logits = inputs @ gate_w.T
    weights, selected = jax.lax.top_k(gate_logits, num_experts_per_tok)
    weights = jax.nn.softmax(weights.astype(jnp.float32), axis=1)
    T, E = gate_logits.shape
    comb = jnp.zeros((T, E), dtype=jnp.float32)
    comb = comb.at[jnp.arange(T)[:, None], selected].add(weights)
    out = jnp.zeros(inputs.shape, jnp.float32)
    for e in range(E):
        h1 = inputs @ w1_all[e]
        h3 = inputs @ w3_all[e]
        ey = ((h1 * jax.nn.sigmoid(h1)) * h3) @ w2_all[e]
        out = out + comb[:, e:e + 1] * ey
    return out.astype(inputs.dtype)


if __name__ == "__main__":
    # Small shapes consistent with the module: 8 tokens, dim=128, hidden=256,
    # 8 experts, top-2 routing.  token_block keeps its production default (256).
    T, D, H, E, K = 8, 128, 256, 8, 2

    key = jax.random.PRNGKey(0)
    k_x, k_g, k_w1, k_w2, k_w3 = jax.random.split(key, 5)

    x = jax.random.normal(k_x, (T, D), dtype=jnp.float32)
    gate_w = jax.random.normal(k_g, (E, D), dtype=jnp.float32) * 0.1
    w1_all = jax.random.normal(k_w1, (E, D, H), dtype=jnp.float32) * 0.1
    w3_all = jax.random.normal(k_w3, (E, D, H), dtype=jnp.float32) * 0.1
    w2_all = jax.random.normal(k_w2, (E, H, D), dtype=jnp.float32) * 0.1

    ref = _reference_forward(x, gate_w, w1_all, w3_all, w2_all, K)

    # Default path: hidden tile auto-sized to full H -> expert weights stay
    # resident across consecutive same-expert row blocks (weight DMA skipped).
    out = moe_layer_forward(x, gate_w, w1_all, w3_all, w2_all,
                            num_experts_per_tok=K)
    out = jax.block_until_ready(out)
    assert out.shape == (T, D)
    assert jnp.allclose(out, ref, atol=2e-3, rtol=2e-3), (
        f"max abs err {jnp.max(jnp.abs(out - ref))}")

    # Hidden-dim tiled path (n_h > 1): f32 accumulation across H tiles.
    out_tiled = moe_layer_forward(x, gate_w, w1_all, w3_all, w2_all,
                                  num_experts_per_tok=K, hidden_block=128,
                                  weight_buffer_count=2)
    out_tiled = jax.block_until_ready(out_tiled)
    assert jnp.allclose(out_tiled, ref, atol=2e-3, rtol=2e-3), (
        f"max abs err {jnp.max(jnp.abs(out_tiled - ref))}")

    print("KERNEL_OK")
</pallas_src>

<mosaic_0001>
module attributes {stable_mosaic.version = 11 : i64} {
  func.func private @main(%arg0: i32) attributes {dimension_semantics = [#tpu.dimension_semantics<core_parallel>], iteration_bounds = array<i64: 2>, tpu.core_type = #tpu.core_type<sc_scalar_subcore>, window_params = []} {
    return
  }
}

module attributes {stable_mosaic.version = 11 : i64} {
  func.func private @main(%arg0: i32) attributes {dimension_semantics = [#tpu.dimension_semantics<core_parallel>], iteration_bounds = array<i64: 2>, tpu.core_type = #tpu.core_type<sc_scalar_subcore>, window_params = []} {
    return
  }
}

module attributes {stable_mosaic.version = 11 : i64} {
  func.func @_moe_grouped_kernel(%arg0: i32, %arg1: i32, %arg2: memref<9xi32, #tpu.memory_space<smem>>, %arg3: memref<9xi32, #tpu.memory_space<smem>>, %arg4: memref<256x128xf32, #tpu.memory_space<vmem>>, %arg5: memref<1x128x256xf32, #tpu.memory_space<vmem>>, %arg6: memref<1x128x256xf32, #tpu.memory_space<vmem>>, %arg7: memref<1x256x128xf32, #tpu.memory_space<vmem>>, %arg8: memref<256x1xf32, #tpu.memory_space<vmem>>, %arg9: memref<256x128xf32, #tpu.memory_space<vmem>>) attributes {dimension_semantics = [#tpu.dimension_semantics<parallel>, #tpu.dimension_semantics<arbitrary>], iteration_bounds = array<i64: 9, 1>, scalar_prefetch = 2 : i64, scratch_operands = 0 : i64, tpu.core_type = #tpu.core_type<tc>, window_params = [{transform_indices = @transform_0, window_bounds = array<i64: 256, 128>}, {transform_indices = @transform_1, window_bounds = array<i64: 1, 128, 256>}, {transform_indices = @transform_2, window_bounds = array<i64: 1, 128, 256>}, {transform_indices = @transform_3, window_bounds = array<i64: 1, 256, 128>}, {transform_indices = @transform_4, window_bounds = array<i64: 256, 1>}, {transform_indices = @transform_5, window_bounds = array<i64: 256, 128>}]} {
    %c0_i32 = arith.constant 0 : i32
    %0 = arith.cmpi eq, %arg1, %c0_i32 : i32
    %1 = arith.extui %0 : i1 to i32
    %c0_i32_0 = arith.constant 0 : i32
    %2 = arith.cmpi ne, %1, %c0_i32_0 : i32
    scf.if %2 {
      %cst = arith.constant 0.000000e+00 : f32
      %11 = vector.broadcast %cst : f32 to vector<256x128xf32>
      %c0 = arith.constant 0 : index
      %c0_5 = arith.constant 0 : index
      %12 = vector.load %arg9[%c0, %c0_5] : memref<256x128xf32, #tpu.memory_space<vmem>>, vector<256x128xf32>
      tpu.vector_store %arg9[%c0, %c0_5], %11 {strides = array<i32>} : memref<256x128xf32, #tpu.memory_space<vmem>>, vector<256x128xf32>,
    } else {
    }
    %3 = arith.index_cast %arg0 : i32 to index
    %4 = memref.load %arg3[%3] : memref<9xi32, #tpu.memory_space<smem>>
    %c0_i32_1 = arith.constant 0 : i32
    %5 = arith.cmpi sgt, %4, %c0_i32_1 : i32
    %6 = arith.extui %5 : i1 to i32
    %c0_i32_2 = arith.constant 0 : i32
    %7 = arith.cmpi ne, %6, %c0_i32_2 : i32
    scf.if %7 {
      %c0 = arith.constant 0 : index
      %c0_5 = arith.constant 0 : index
      %11 = vector.load %arg4[%c0, %c0_5] : memref<256x128xf32, #tpu.memory_space<vmem>>, vector<256x128xf32>
      %c0_6 = arith.constant 0 : index
      %c0_7 = arith.constant 0 : index
      %c0_8 = arith.constant 0 : index
      %12 = vector.load %arg5[%c0_6, %c0_7, %c0_8] : memref<1x128x256xf32, #tpu.memory_space<vmem>>, vector<1x128x256xf32>
      %13 = vector.shape_cast %12 : vector<1x128x256xf32> to vector<128x256xf32>
      %cst = arith.constant dense<0.000000e+00> : vector<256x256xf32>
      %14 = tpu.matmul %11, %13, %cst {dimension_numbers = #tpu.dot_dimension_numbers<[1], [0], [0], [1], [0, 0, 1, 1], [], []>} : vector<256x128xf32>, vector<128x256xf32>, vector<256x256xf32> -> vector<256x256xf32>
      %c0_9 = arith.constant 0 : index
      %c0_10 = arith.constant 0 : index
      %c0_11 = arith.constant 0 : index
      %15 = vector.load %arg6[%c0_9, %c0_10, %c0_11] : memref<1x128x256xf32, #tpu.memory_space<vmem>>, vector<1x128x256xf32>
      %16 = vector.shape_cast %15 : vector<1x128x256xf32> to vector<128x256xf32>
      %cst_12 = arith.constant dense<0.000000e+00> : vector<256x256xf32>
      %17 = tpu.matmul %11, %16, %cst_12 {dimension_numbers = #tpu.dot_dimension_numbers<[1], [0], [0], [1], [0, 0, 1, 1], [], []>} : vector<256x128xf32>, vector<128x256xf32>, vector<256x256xf32> -> vector<256x256xf32>
      %18 = arith.negf %14 : vector<256x256xf32>
      %19 = math.exp %18 : vector<256x256xf32>
      %cst_13 = arith.constant 1.000000e+00 : f32
      %20 = vector.broadcast %cst_13 : f32 to vector<256x256xf32>
      %21 = arith.addf %20, %19 : vector<256x256xf32>
      %22 = arith.divf %20, %21 : vector<256x256xf32>
      %23 = arith.mulf %14, %22 : vector<256x256xf32>
      %24 = arith.mulf %23, %17 : vector<256x256xf32>
      %c0_14 = arith.constant 0 : index
      %c0_15 = arith.constant 0 : index
      %25 = vector.load %arg9[%c0_14, %c0_15] : memref<256x128xf32, #tpu.memory_space<vmem>>, vector<256x128xf32>
      %c0_16 = arith.constant 0 : index
      %c0_17 = arith.constant 0 : index
      %c0_18 = arith.constant 0 : index
      %26 = vector.load %arg7[%c0_16, %c0_17, %c0_18] : memref<1x256x128xf32, #tpu.memory_space<vmem>>, vector<1x256x128xf32>
      %27 = vector.shape_cast %26 : vector<1x256x128xf32> to vector<256x128xf32>
      %cst_19 = arith.constant dense<0.000000e+00> : vector<256x128xf32>
      %28 = tpu.matmul %24, %27, %cst_19 {dimension_numbers = #tpu.dot_dimension_numbers<[1], [0], [0], [1], [0, 0, 1, 1], [], []>} : vector<256x256xf32>, vector<256x128xf32>, vector<256x128xf32> -> vector<256x128xf32>
      %29 = arith.addf %25, %28 : vector<256x128xf32>
      %c0_20 = arith.constant 0 : index
      %c0_21 = arith.constant 0 : index
      %30 = vector.load %arg9[%c0_20, %c0_21] : memref<256x128xf32, #tpu.memory_space<vmem>>, vector<256x128xf32>
      tpu.vector_store %arg9[%c0_20, %c0_21], %29 {strides = array<i32>} : memref<256x128xf32, #tpu.memory_space<vmem>>, vector<256x128xf32>,
    } else {
    }
    %c0_i32_3 = arith.constant 0 : i32
    %8 = arith.cmpi eq, %arg1, %c0_i32_3 : i32
    %9 = arith.extui %8 : i1 to i32
    %c0_i32_4 = arith.constant 0 : i32
    %10 = arith.cmpi ne, %9, %c0_i32_4 : i32
    scf.if %10 {
      %c0 = arith.constant 0 : index
      %c0_5 = arith.constant 0 : index
      %11 = vector.load %arg8[%c0, %c0_5] : memref<256x1xf32, #tpu.memory_space<vmem>>, vector<256x1xf32>
      %c0_6 = arith.constant 0 : index
      %c0_7 = arith.constant 0 : index
      %12 = vector.load %arg9[%c0_6, %c0_7] : memref<256x128xf32, #tpu.memory_space<vmem>>, vector<256x128xf32>
      %13 = vector.broadcast %11 : vector<256x1xf32> to vector<256x128xf32>
      %14 = arith.mulf %13, %12 : vector<256x128xf32>
      %c0_8 = arith.constant 0 : index
      %c0_9 = arith.constant 0 : index
      %15 = vector.load %arg9[%c0_8, %c0_9] : memref<256x128xf32, #tpu.memory_space<vmem>>, vector<256x128xf32>
      tpu.vector_store %arg9[%c0_8, %c0_9], %14 {strides = array<i32>} : memref<256x128xf32, #tpu.memory_space<vmem>>, vector<256x128xf32>,
    } else {
    }
    return
  }
  func.func @transform_0(%arg0: i32, %arg1: i32, %arg2: memref<9xi32, #tpu.memory_space<smem>>, %arg3: memref<9xi32, #tpu.memory_space<smem>>) -> (i32, i32) {
    %c0_i32 = arith.constant 0 : i32
    %c0_i32_0 = arith.constant 0 : i32
    return %arg0, %c0_i32 : i32, i32
  }
  func.func @transform_1(%arg0: i32, %arg1: i32, %arg2: memref<9xi32, #tpu.memory_space<smem>>, %arg3: memref<9xi32, #tpu.memory_space<smem>>) -> (i32, i32, i32) {
    %0 = arith.index_cast %arg0 : i32 to index
    %1 = memref.load %arg2[%0] : memref<9xi32, #tpu.memory_space<smem>>
    %c0_i32 = arith.constant 0 : i32
    %c0_i32_0 = arith.constant 0 : i32
    return %1, %c0_i32, %arg1 : i32, i32, i32
  }
  func.func @transform_2(%arg0: i32, %arg1: i32, %arg2: memref<9xi32, #tpu.memory_space<smem>>, %arg3: memref<9xi32, #tpu.memory_space<smem>>) -> (i32, i32, i32) {
    %0 = arith.index_cast %arg0 : i32 to index
    %1 = memref.load %arg2[%0] : memref<9xi32, #tpu.memory_space<smem>>
    %c0_i32 = arith.constant 0 : i32
    %c0_i32_0 = arith.constant 0 : i32
    return %1, %c0_i32, %arg1 : i32, i32, i32
  }
  func.func @transform_3(%arg0: i32, %arg1: i32, %arg2: memref<9xi32, #tpu.memory_space<smem>>, %arg3: memref<9xi32, #tpu.memory_space<smem>>) -> (i32, i32, i32) {
    %0 = arith.index_cast %arg0 : i32 to index
    %1 = memref.load %arg2[%0] : memref<9xi32, #tpu.memory_space<smem>>
    %c0_i32 = arith.constant 0 : i32
    %c0_i32_0 = arith.constant 0 : i32
    return %1, %arg1, %c0_i32 : i32, i32, i32
  }
  func.func @transform_4(%arg0: i32, %arg1: i32, %arg2: memref<9xi32, #tpu.memory_space<smem>>, %arg3: memref<9xi32, #tpu.memory_space<smem>>) -> (i32, i32) {
    %c0_i32 = arith.constant 0 : i32
    %c0_i32_0 = arith.constant 0 : i32
    return %arg0, %c0_i32 : i32, i32
  }
  func.func @transform_5(%arg0: i32, %arg1: i32, %arg2: memref<9xi32, #tpu.memory_space<smem>>, %arg3: memref<9xi32, #tpu.memory_space<smem>>) -> (i32, i32) {
    %c0_i32 = arith.constant 0 : i32
    %c0_i32_0 = arith.constant 0 : i32
    return %arg0, %c0_i32 : i32, i32
  }
}

</mosaic_0001>

<llo_original>
// kernel: custom-call.1
$region0: #{custom-call.1}
  %s0 = inlined_call_operand.vmem [shape: u32[2304], index: 0, kind: output, shape index: {}]

// kernel: moe_layer_forward.1
$region0: #{moe_layer_forward.1}
  #allocation0 [shape = 'u32[]', space=smem, size = 0x4, offset = 0x4, fixed_abs, tag = 'smem constant byte address 0x4 - core index']
  #allocation1 [shape = 'u32[144,128]{1,0:T(1,128)}', space=vmem, size = 0x12000, scoped, tag = 'internal scratch']
  #allocation2 [shape = 's32[1]{0}', space=sflag, size = 0x4, scoped, tag = 'scoped memory for moe_layer_forward.1']
  #allocation3 [shape = 'u8[512]{0}', space=smem, size = 0x200, scoped, tag = 'prefetched SMEM operand 0']
  #allocation4 [shape = 'u8[512]{0}', space=smem, size = 0x200, scoped, tag = 'prefetched SMEM operand 1']
  %s0 = inlined_call_operand.vmem [shape: s32[9], index: 0, kind: input, shape index: {}]
  %s1 = inlined_call_operand.vmem [shape: s32[9], index: 1, kind: input, shape index: {}]
  %s2 = inlined_call_operand.vmem [shape: f32[2304,128], index: 2, kind: input, shape index: {}]
  %s3 = inlined_call_operand.vmem [shape: f32[8,128,256], index: 3, kind: input, shape index: {}]
  %s4 = inlined_call_operand.vmem [shape: f32[8,128,256], index: 4, kind: input, shape index: {}]
  %s5 = inlined_call_operand.vmem [shape: f32[8,256,128], index: 5, kind: input, shape index: {}]
  %s6 = inlined_call_operand.vmem [shape: f32[2304,1], index: 6, kind: input, shape index: {}]
  %s7 = inlined_call_operand.vmem [shape: f32[2304,128], index: 7, kind: output, shape index: {}]
  %s8 = sld [smem:[#allocation0]]
  $region65: #{moe_layer_forward.1} parent=0
    _
  %s10 = ssub.s32 1, %s8
  %s11 = scalar_select 0, %s10, %s8
  %s12 = sshll.u32 %s0, 4
  %s13 = int_to_ptr.vmem [resolvable:$true] %s12
  %15 = dma.vmem_to_smem %s13, 16, [#allocation3], [#allocation2]
  %s16 = sshll.u32 %s1, 4
  %s17 = int_to_ptr.vmem [resolvable:$true] %s16
  %19 = dma.vmem_to_smem %s17, 16, [#allocation4], [#allocation2]
  %20 = dma.done [#allocation2], 32
  %21 = sfence
  loop: start=0, step=1, limit=11
  $region2: #{moe_layer_forward.1} parent=0 // loop_pre_header
    _
  $region3: #{moe_layer_forward.1} parent=0 // loop_header
    %s23 = sphi 0, %s27
    %p24 = scmp.ge.s32.totalorder %s23, 11
    %s30 = sphi 0, %s42
    %s31 = sphi 0, %s38
    %s32 = sphi 0, %s30
    %s33 = sphi 0, %s31
    %s34 = sphi 0, %s32
    %s35 = sphi 0, %s33
    %s45 = sphi 0, %s47
    %s48 = sphi 0, %s45
    %s49 = sphi 0, %s48
    %s65 = sphi 0, %s49
    %s75 = sphi 0, %s77
    %s78 = sphi 0, %s75
    %s79 = sphi 0, %s78
    %s95 = sphi 0, %s79
    %s105 = sphi 0, %s107
    %s108 = sphi 0, %s105
    %s109 = sphi 0, %s108
    %s125 = sphi 0, %s109
    %s135 = sphi 0, %s137
    %s138 = sphi 0, %s135
    %s139 = sphi 0, %s138
    %s155 = sphi 0, %s139
    %s161 = sphi 0, %s163
    %s164 = sphi 0, %s161
    %s165 = sphi 0, %s164
    %s181 = sphi 0, %s165
    %s187 = sphi 0, %s189
    %s190 = sphi 0, %s187
    %s191 = sphi 0, %s190
    %s207 = sphi 0, %s191
  $region4: #{moe_layer_forward.1} parent=0 // loop_header_branch
    %26 = sbr.rel (%p24) target = $region8
  $region5: #{moe_layer_forward.1} parent=0 // loop_body
    %s28 = ssub.s32 %s23, 1
    %s29 = ssub.s32 %s23, 2
    %s36 = sadd.s32 1, %s31
    %p37 = scmp.ge.s32.totalorder %s36, 1
    %s38 = scalar_select %p37, 0, %s36
    %s39 = sadd.s32 1, %s30
    %s40 = scalar_select %p37, %s39, %s30
    %p41 = scmp.ge.s32.totalorder %s40, 9
    %s42 = scalar_select %p41, 0, %s40
    %s43 = ssub.s32 %s30, %s42
    %p44 = scmp.eq.s32.totalorder %s43, 0
    %s46 = sadd.s32 %s45, 1
    %s47 = scalar_select %p44, %s45, %s46
    %p50 = pneg %p44
    %p51 = scmp.eq.s32.totalorder %s23, 8
    %p52 = por %p50, %p51
    %p53 = scmp.ne.s32.totalorder %s45, %s48
    %p54 = scmp.eq.s32.totalorder %s23, 0
    %p55 = por %p53, %p54
    %p56 = scmp.ne.s32.totalorder %s45, %s48
    %p57 = scmp.eq.s32.totalorder %s28, 8
    %p58 = por %p56, %p57
    %p59 = scmp.ne.s32.totalorder %s48, %s49
    %p60 = scmp.eq.s32.totalorder %s28, 0
    %p61 = por %p59, %p60
    %p62 = scmp.ne.s32.totalorder %s48, %s49
    %p63 = scmp.eq.s32.totalorder %s29, 8
    %p64 = por %p62, %p63
    %p66 = scmp.ne.s32.totalorder %s49, %s65
    %p67 = scmp.eq.s32.totalorder %s29, 0
    %p68 = por %p66, %p67
    %s69 = sld [smem:[#allocation3 + %s30]]
    %s70 = sld [smem:[#allocation3 + %s42]]
    %s71 = ssub.s32 %s69, %s70
    %s72 = ssub.s32 %s31, %s38
    %s73 = sor.u32 %s71, %s72
    %p74 = scmp.eq.s32.totalorder %s73, 0
    %s76 = sadd.s32 %s75, 1
    %s77 = scalar_select %p74, %s75, %s76
    %p80 = pneg %p74
    %p81 = scmp.eq.s32.totalorder %s23, 8
    %p82 = por %p80, %p81
    %p83 = scmp.ne.s32.totalorder %s75, %s78
    %p84 = scmp.eq.s32.totalorder %s23, 0
    %p85 = por %p83, %p84
    %p86 = scmp.ne.s32.totalorder %s75, %s78
    %p87 = scmp.eq.s32.totalorder %s28, 8
    %p88 = por %p86, %p87
    %p89 = scmp.ne.s32.totalorder %s78, %s79
    %p90 = scmp.eq.s32.totalorder %s28, 0
    %p91 = por %p89, %p90
    %p92 = scmp.ne.s32.totalorder %s78, %s79
    %p93 = scmp.eq.s32.totalorder %s29, 8
    %p94 = por %p92, %p93
    %p96 = scmp.ne.s32.totalorder %s79, %s95
    %p97 = scmp.eq.s32.totalorder %s29, 0
    %p98 = por %p96, %p97
    %s99 = sld [smem:[#allocation3 + %s30]]
    %s100 = sld [smem:[#allocation3 + %s42]]
    %s101 = ssub.s32 %s99, %s100
    %s102 = ssub.s32 %s31, %s38
    %s103 = sor.u32 %s101, %s102
    %p104 = scmp.eq.s32.totalorder %s103, 0
    %s106 = sadd.s32 %s105, 1
    %s107 = scalar_select %p104, %s105, %s106
    %p110 = pneg %p104
    %p111 = scmp.eq.s32.totalorder %s23, 8
    %p112 = por %p110, %p111
    %p113 = scmp.ne.s32.totalorder %s105, %s108
    %p114 = scmp.eq.s32.totalorder %s23, 0
    %p115 = por %p113, %p114
    %p116 = scmp.ne.s32.totalorder %s105, %s108
    %p117 = scmp.eq.s32.totalorder %s28, 8
    %p118 = por %p116, %p117
    %p119 = scmp.ne.s32.totalorder %s108, %s109
    %p120 = scmp.eq.s32.totalorder %s28, 0
    %p121 = por %p119, %p120
    %p122 = scmp.ne.s32.totalorder %s108, %s109
    %p123 = scmp.eq.s32.totalorder %s29, 8
    %p124 = por %p122, %p123
    %p126 = scmp.ne.s32.totalorder %s109, %s125
    %p127 = scmp.eq.s32.totalorder %s29, 0
    %p128 = por %p126, %p127
    %s129 = sld [smem:[#allocation3 + %s30]]
    %s130 = sld [smem:[#allocation3 + %s42]]
    %s131 = ssub.s32 %s129, %s130
    %s132 = ssub.s32 %s31, %s38
    %s133 = sor.u32 %s131, %s132
    %p134 = scmp.eq.s32.totalorder %s133, 0
    %s136 = sadd.s32 %s135, 1
    %s137 = scalar_select %p134, %s135, %s136
    %p140 = pneg %p134
    %p141 = scmp.eq.s32.totalorder %s23, 8
    %p142 = por %p140, %p141
    %p143 = scmp.ne.s32.totalorder %s135, %s138
    %p144 = scmp.eq.s32.totalorder %s23, 0
    %p145 = por %p143, %p144
    %p146 = scmp.ne.s32.totalorder %s135, %s138
    %p147 = scmp.eq.s32.totalorder %s28, 8
    %p148 = por %p146, %p147
    %p149 = scmp.ne.s32.totalorder %s138, %s139
    %p150 = scmp.eq.s32.totalorder %s28, 0
    %p151 = por %p149, %p150
    %p152 = scmp.ne.s32.totalorder %s138, %s139
    %p153 = scmp.eq.s32.totalorder %s29, 8
    %p154 = por %p152, %p153
    %p156 = scmp.ne.s32.totalorder %s139, %s155
    %p157 = scmp.eq.s32.totalorder %s29, 0
    %p158 = por %p156, %p157
    %s159 = ssub.s32 %s30, %s42
    %p160 = scmp.eq.s32.totalorder %s159, 0
    %s162 = sadd.s32 %s161, 1
    %s163 = scalar_select %p160, %s161, %s162
    %p166 = pneg %p160
    %p167 = scmp.eq.s32.totalorder %s23, 8
    %p168 = por %p166, %p167
    %p169 = scmp.ne.s32.totalorder %s161, %s164
    %p170 = scmp.eq.s32.totalorder %s23, 0
    %p171 = por %p169, %p170
    %p172 = scmp.ne.s32.totalorder %s161, %s164
    %p173 = scmp.eq.s32.totalorder %s28, 8
    %p174 = por %p172, %p173
    %p175 = scmp.ne.s32.totalorder %s164, %s165
    %p176 = scmp.eq.s32.totalorder %s28, 0
    %p177 = por %p175, %p176
    %p178 = scmp.ne.s32.totalorder %s164, %s165
    %p179 = scmp.eq.s32.totalorder %s29, 8
    %p180 = por %p178, %p179
    %p182 = scmp.ne.s32.totalorder %s165, %s181
    %p183 = scmp.eq.s32.totalorder %s29, 0
    %p184 = por %p182, %p183
    %s185 = ssub.s32 %s30, %s42
    %p186 = scmp.eq.s32.totalorder %s185, 0
    %s188 = sadd.s32 %s187, 1
    %s189 = scalar_select %p186, %s187, %s188
    %p192 = pneg %p186
    %p193 = scmp.eq.s32.totalorder %s23, 8
    %p194 = por %p192, %p193
    %p195 = scmp.ne.s32.totalorder %s187, %s190
    %p196 = scmp.eq.s32.totalorder %s23, 0
    %p197 = por %p195, %p196
    %p198 = scmp.ne.s32.totalorder %s187, %s190
    %p199 = scmp.eq.s32.totalorder %s28, 8
    %p200 = por %p198, %p199
    %p201 = scmp.ne.s32.totalorder %s190, %s191
    %p202 = scmp.eq.s32.totalorder %s28, 0
    %p203 = por %p201, %p202
    %p204 = scmp.ne.s32.totalorder %s190, %s191
    %p205 = scmp.eq.s32.totalorder %s29, 8
    %p206 = por %p204, %p205
    %p208 = scmp.ne.s32.totalorder %s191, %s207
    %p209 = scmp.eq.s32.totalorder %s29, 0
    %p210 = por %p208, %p209
    %p211 = scmp.le.s32.totalorder 1, %s23
    %p212 = scmp.lt.s32.totalorder %s23, 10
    %p213 = pnand %p211, %p212
    %p214 = pneg %p213
    // Predicated region
    $region9: #{moe_layer_forward.1} parent=5 // pred_check
      _
    $region10: #{moe_layer_forward.1} parent=5 // pred_check_branch
      %216 = sbr.rel (%p213) target = $region12
    $region11: #{moe_layer_forward.1} parent=5 // pred_region
      %s217 = ssub.s32 %s23, 1
    $region12: #{moe_layer_forward.1} parent=5 // pred_fallthru
      _
    %p218 = scmp.lt.s32.totalorder %s23, 9
    // Predicated region
    $region13: #{moe_layer_forward.1} parent=5 // pred_check
      %p219 = pneg %p218
    $region14: #{moe_layer_forward.1} parent=5 // pred_check_branch
      %221 = sbr.rel (%p219) target = $region16
    $region15: #{moe_layer_forward.1} parent=5 // pred_region
      // Predicated region
      $region17: #{moe_layer_forward.1} parent=15 // pred_check
        %p222 = pneg %p55
      $region18: #{moe_layer_forward.1} parent=15 // pred_check_branch
        %224 = sbr.rel (%p222) target = $region20
      $region19: #{moe_layer_forward.1} parent=15 // pred_region
        %s225 = smul.u32 32, %s30
        %p226 = scmp.lt.s32.totalorder %s225, 287
        %s227 = scalar_select %p226, %s225, 287
        %s228 = smul.addr %s227, 8
        %s229 = scalar_lea.vmem %s2, %s228
        %s230 = smul.u32 32, %s30
      $region20: #{moe_layer_forward.1} parent=15 // pred_fallthru
        _
      // Predicated region
      $region21: #{moe_layer_forward.1} parent=15 // pred_check
        %p231 = pneg %p85
      $region22: #{moe_layer_forward.1} parent=15 // pred_check_branch
        %233 = sbr.rel (%p231) target = $region24
      $region23: #{moe_layer_forward.1} parent=15 // pred_region
        %s234 = sld [smem:[#allocation3 + %s30]]
        %s235 = smul.u32 2, %s31
        %p236 = scmp.lt.s32.totalorder %s234, 7
        %s237 = scalar_select %p236, %s234, 7
        %p238 = scmp.lt.s32.totalorder %s235, 1
        %s239 = scalar_select %p238, %s235, 1
        %s240 = smul.addr %s237, 32
        %s241 = sadd.s32 %s239, %s240
        %s242 = smul.addr %s241, 8
        %s243 = scalar_lea.vmem %s3, %s242
        %s244 = sld [smem:[#allocation3 + %s30]]
        %s245 = smul.u32 2, %s31
      $region24: #{moe_layer_forward.1} parent=15 // pred_fallthru
        _
      // Predicated region
      $region25: #{moe_layer_forward.1} parent=15 // pred_check
        %p246 = pneg %p115
      $region26: #{moe_layer_forward.1} parent=15 // pred_check_branch
        %248 = sbr.rel (%p246) target = $region28
      $region27: #{moe_layer_forward.1} parent=15 // pred_region
        %s249 = sld [smem:[#allocation3 + %s30]]
        %s250 = smul.u32 2, %s31
        %p251 = scmp.lt.s32.totalorder %s249, 7
        %s252 = scalar_select %p251, %s249, 7
        %p253 = scmp.lt.s32.totalorder %s250, 1
        %s254 = scalar_select %p253, %s250, 1
        %s255 = smul.addr %s252, 32
        %s256 = sadd.s32 %s254, %s255
        %s257 = smul.addr %s256, 8
        %s258 = scalar_lea.vmem %s4, %s257
        %s259 = sld [smem:[#allocation3 + %s30]]
        %s260 = smul.u32 2, %s31
      $region28: #{moe_layer_forward.1} parent=15 // pred_fallthru
        _
      // Predicated region
      $region29: #{moe_layer_forward.1} parent=15 // pred_check
        %p261 = pneg %p145
      $region30: #{moe_layer_forward.1} parent=15 // pred_check_branch
        %263 = sbr.rel (%p261) target = $region32
      $region31: #{moe_layer_forward.1} parent=15 // pred_region
        %s264 = sld [smem:[#allocation3 + %s30]]
        %s265 = smul.u32 32, %s31
        %p266 = scmp.lt.s32.totalorder %s264, 7
        %s267 = scalar_select %p266, %s264, 7
        %p268 = scmp.lt.s32.totalorder %s265, 31
        %s269 = scalar_select %p268, %s265, 31
        %s270 = smul.addr %s267, 32
        %s271 = sadd.s32 %s269, %s270
        %s272 = smul.addr %s271, 8
        %s273 = scalar_lea.vmem %s5, %s272
        %s274 = sld [smem:[#allocation3 + %s30]]
        %s275 = smul.u32 32, %s31
      $region32: #{moe_layer_forward.1} parent=15 // pred_fallthru
        _
      // Predicated region
      $region33: #{moe_layer_forward.1} parent=15 // pred_check
        %p276 = pneg %p171
      $region34: #{moe_layer_forward.1} parent=15 // pred_check_branch
        %278 = sbr.rel (%p276) target = $region36
      $region35: #{moe_layer_forward.1} parent=15 // pred_region
        %s279 = smul.u32 32, %s30
        %p280 = scmp.lt.s32.totalorder %s279, 287
        %s281 = scalar_select %p280, %s279, 287
        %s282 = smul.addr %s281, 8
        %s283 = scalar_lea.vmem %s6, %s282
        %s284 = smul.u32 32, %s30
      $region36: #{moe_layer_forward.1} parent=15 // pred_fallthru
        _
    $region16: #{moe_layer_forward.1} parent=5 // pred_fallthru
      _
    %p285 = scmp.le.s32.totalorder 1, %s23
    %p286 = scmp.lt.s32.totalorder %s23, 10
    %p287 = pnand %p285, %p286
    %p288 = pneg %p287
    // Predicated region
    $region37: #{moe_layer_forward.1} parent=5 // pred_check
      _
    $region38: #{moe_layer_forward.1} parent=5 // pred_check_branch
      %290 = sbr.rel (%p287) target = $region40
    $region39: #{moe_layer_forward.1} parent=5 // pred_region
      %s291 = ssub.s32 %s23, 1
      %s292 = smul.u32 32, %s32
      %p293 = scmp.lt.s32.totalorder %s292, 287
      %s294 = scalar_select %p293, %s292, 287
      %s295 = smul.addr %s294, 8
      %s296 = scalar_lea.vmem %s2, %s295
      %p297 = pneg %p61
      %p298 = pneg %p58
      %s299 = sld [smem:[#allocation3 + %s32]]
      %s300 = smul.u32 2, %s33
      %p301 = scmp.lt.s32.totalorder %s299, 7
      %s302 = scalar_select %p301, %s299, 7
      %p303 = scmp.lt.s32.totalorder %s300, 1
      %s304 = scalar_select %p303, %s300, 1
      %s305 = smul.addr %s302, 32
      %s306 = sadd.s32 %s304, %s305
      %s307 = smul.addr %s306, 8
      %s308 = scalar_lea.vmem %s3, %s307
      %p309 = pneg %p91
      %p310 = pneg %p88
      %s311 = sld [smem:[#allocation3 + %s32]]
      %s312 = smul.u32 2, %s33
      %p313 = scmp.lt.s32.totalorder %s311, 7
      %s314 = scalar_select %p313, %s311, 7
      %p315 = scmp.lt.s32.totalorder %s312, 1
      %s316 = scalar_select %p315, %s312, 1
      %s317 = smul.addr %s314, 32
      %s318 = sadd.s32 %s316, %s317
      %s319 = smul.addr %s318, 8
      %s320 = scalar_lea.vmem %s4, %s319
      %p321 = pneg %p121
      %p322 = pneg %p118
      %s323 = sld [smem:[#allocation3 + %s32]]
      %s324 = smul.u32 32, %s33
      %p325 = scmp.lt.s32.totalorder %s323, 7
      %s326 = scalar_select %p325, %s323, 7
      %p327 = scmp.lt.s32.totalorder %s324, 31
      %s328 = scalar_select %p327, %s324, 31
      %s329 = smul.addr %s326, 32
      %s330 = sadd.s32 %s328, %s329
      %s331 = smul.addr %s330, 8
      %s332 = scalar_lea.vmem %s5, %s331
      %p333 = pneg %p151
      %p334 = pneg %p148
      %s335 = smul.u32 32, %s32
      %p336 = scmp.lt.s32.totalorder %s335, 287
      %s337 = scalar_select %p336, %s335, 287
      %s338 = smul.addr %s337, 8
      %s339 = scalar_lea.vmem %s6, %s338
      %p340 = pneg %p177
      %p341 = pneg %p174
      %p342 = pneg %p203
      %p343 = pneg %p200
      %s344 = smul.u32 32, %s32
      %p345 = scmp.lt.s32.totalorder %s344, 287
      %s346 = scalar_select %p345, %s344, 287
      %s347 = smul.addr %s346, 8
      %s348 = scalar_lea.vmem %s7, %s347
      %s349 = smul.u32 32, %s32
      %p350 = scmp.lt.s32.totalorder %s349, 287
      %s351 = scalar_select %p350, %s349, 287
      %s352 = smul.addr %s351, 8
      %s353 = scalar_lea.vmem %s2, %s352
      %s354 = smul.u32 32, %s32
      %s355 = sld [smem:[#allocation3 + %s32]]
      %s356 = smul.u32 2, %s33
      %p357 = scmp.lt.s32.totalorder %s355, 7
      %s358 = scalar_select %p357, %s355, 7
      %p359 = scmp.lt.s32.totalorder %s356, 1
      %s360 = scalar_select %p359, %s356, 1
      %s361 = smul.addr %s358, 32
      %s362 = sadd.s32 %s360, %s361
      %s363 = smul.addr %s362, 8
      %s364 = scalar_lea.vmem %s3, %s363
      %s365 = sld [smem:[#allocation3 + %s32]]
      %s366 = smul.u32 2, %s33
      %s367 = sld [smem:[#allocation3 + %s32]]
      %s368 = smul.u32 2, %s33
      %p369 = scmp.lt.s32.totalorder %s367, 7
      %s370 = scalar_select %p369, %s367, 7
      %p371 = scmp.lt.s32.totalorder %s368, 1
      %s372 = scalar_select %p371, %s368, 1
      %s373 = smul.addr %s370, 32
      %s374 = sadd.s32 %s372, %s373
      %s375 = smul.addr %s374, 8
      %s376 = scalar_lea.vmem %s4, %s375
      %s377 = sld [smem:[#allocation3 + %s32]]
      %s378 = smul.u32 2, %s33
      %s379 = sld [smem:[#allocation3 + %s32]]
      %s380 = smul.u32 32, %s33
      %p381 = scmp.lt.s32.totalorder %s379, 7
      %s382 = scalar_select %p381, %s379, 7
      %p383 = scmp.lt.s32.totalorder %s380, 31
      %s384 = scalar_select %p383, %s380, 31
      %s385 = smul.addr %s382, 32
      %s386 = sadd.s32 %s384, %s385
      %s387 = smul.addr %s386, 8
      %s388 = scalar_lea.vmem %s5, %s387
      %s389 = sld [smem:[#allocation3 + %s32]]
      %s390 = smul.u32 32, %s33
      %s391 = smul.u32 32, %s32
      %p392 = scmp.lt.s32.totalorder %s391, 287
      %s393 = scalar_select %p392, %s391, 287
      %s394 = smul.addr %s393, 8
      %s395 = scalar_lea.vmem %s6, %s394
      %s396 = smul.u32 32, %s32
      %s397 = smul.u32 32, %s32
      %p398 = scmp.lt.s32.totalorder %s397, 287
      %s399 = scalar_select %p398, %s397, 287
      %s400 = smul.addr %s399, 8
      %s401 = scalar_lea.vmem %s7, %s400
      %s402 = smul.u32 32, %s32
      %p403 = scmp.eq.s32.totalorder %s33, 0
      // Predicated region
      $region41: #{moe_layer_forward.1} parent=39 // pred_check
        %p404 = pneg %p403
      $region42: #{moe_layer_forward.1} parent=39 // pred_check_branch
        %406 = sbr.rel (%p404) target = $region44
      $region43: #{moe_layer_forward.1} parent=39 // pred_region
        %407 = vst [vmem:[%s401] sm:$0xff] 0.0
        %408 = vst [vmem:[%s401 + $0x8] sm:$0xff] 0.0
        %409 = vst [vmem:[%s401 + $0x10] sm:$0xff] 0.0
        %410 = vst [vmem:[%s401 + $0x18] sm:$0xff] 0.0
        %411 = vst [vmem:[%s401 + $0x20] sm:$0xff] 0.0
        %412 = vst [vmem:[%s401 + $0x28] sm:$0xff] 0.0
        %413 = vst [vmem:[%s401 + $0x30] sm:$0xff] 0.0
        %414 = vst [vmem:[%s401 + $0x38] sm:$0xff] 0.0
        %415 = vst [vmem:[%s401 + $0x40] sm:$0xff] 0.0
        %416 = vst [vmem:[%s401 + $0x48] sm:$0xff] 0.0
        %417 = vst [vmem:[%s401 + $0x50] sm:$0xff] 0.0
        %418 = vst [vmem:[%s401 + $0x58] sm:$0xff] 0.0
        %419 = vst [vmem:[%s401 + $0x60] sm:$0xff] 0.0
        %420 = vst [vmem:[%s401 + $0x68] sm:$0xff] 0.0
        %421 = vst [vmem:[%s401 + $0x70] sm:$0xff] 0.0
        %422 = vst [vmem:[%s401 + $0x78] sm:$0xff] 0.0
        %423 = vst [vmem:[%s401 + $0x80] sm:$0xff] 0.0
        %424 = vst [vmem:[%s401 + $0x88] sm:$0xff] 0.0
        %425 = vst [vmem:[%s401 + $0x90] sm:$0xff] 0.0
        %426 = vst [vmem:[%s401 + $0x98] sm:$0xff] 0.0
        %427 = vst [vmem:[%s401 + $0xa0] sm:$0xff] 0.0
        %428 = vst [vmem:[%s401 + $0xa8] sm:$0xff] 0.0
        %429 = vst [vmem:[%s401 + $0xb0] sm:$0xff] 0.0
        %430 = vst [vmem:[%s401 + $0xb8] sm:$0xff] 0.0
        %431 = vst [vmem:[%s401 + $0xc0] sm:$0xff] 0.0
        %432 = vst [vmem:[%s401 + $0xc8] sm:$0xff] 0.0
        %433 = vst [vmem:[%s401 + $0xd0] sm:$0xff] 0.0
        %434 = vst [vmem:[%s401 + $0xd8] sm:$0xff] 0.0
        %435 = vst [vmem:[%s401 + $0xe0] sm:$0xff] 0.0
        %436 = vst [vmem:[%s401 + $0xe8] sm:$0xff] 0.0
        %437 = vst [vmem:[%s401 + $0xf0] sm:$0xff] 0.0
        %438 = vst [vmem:[%s401 + $0xf8] sm:$0xff] 0.0
      $region44: #{moe_layer_forward.1} parent=39 // pred_fallthru
        _
      %s439 = sld [smem:[#allocation4 + %s32]]
      %p440 = scmp.gt.s32.totalorder %s439, 0
      // Predicated region
      $region45: #{moe_layer_forward.1} parent=39 // pred_check
        %p441 = pneg %p440
      $region46: #{moe_layer_forward.1} parent=39 // pred_check_branch
        %443 = sbr.rel (%p441) target = $region48
      $region47: #{moe_layer_forward.1} parent=39 // pred_region
        %v444 = vld [vmem:[%s353] sm:$0xff]
        %v445 = vld [vmem:[%s353 + $0x8] sm:$0xff]
        %v446 = vld [vmem:[%s353 + $0x10] sm:$0xff]
        %v447 = vld [vmem:[%s353 + $0x18] sm:$0xff]
        %v448 = vld [vmem:[%s353 + $0x20] sm:$0xff]
        %v449 = vld [vmem:[%s353 + $0x28] sm:$0xff]
        %v450 = vld [vmem:[%s353 + $0x30] sm:$0xff]
        %v451 = vld [vmem:[%s353 + $0x38] sm:$0xff]
        %v452 = vld [vmem:[%s353 + $0x40] sm:$0xff]
        %v453 = vld [vmem:[%s353 + $0x48] sm:$0xff]
        %v454 = vld [vmem:[%s353 + $0x50] sm:$0xff]
        %v455 = vld [vmem:[%s353 + $0x58] sm:$0xff]
        %v456 = vld [vmem:[%s353 + $0x60] sm:$0xff]
        %v457 = vld [vmem:[%s353 + $0x68] sm:$0xff]
        %v458 = vld [vmem:[%s353 + $0x70] sm:$0xff]
        %v459 = vld [vmem:[%s353 + $0x78] sm:$0xff]
        %v460 = vld [vmem:[%s353 + $0x80] sm:$0xff]
        %v461 = vld [vmem:[%s353 + $0x88] sm:$0xff]
        %v462 = vld [vmem:[%s353 + $0x90] sm:$0xff]
        %v463 = vld [vmem:[%s353 + $0x98] sm:$0xff]
        %v464 = vld [vmem:[%s353 + $0xa0] sm:$0xff]
        %v465 = vld [vmem:[%s353 + $0xa8] sm:$0xff]
        %v466 = vld [vmem:[%s353 + $0xb0] sm:$0xff]
        %v467 = vld [vmem:[%s353 + $0xb8] sm:$0xff]
        %v468 = vld [vmem:[%s353 + $0xc0] sm:$0xff]
        %v469 = vld [vmem:[%s353 + $0xc8] sm:$0xff]
        %v470 = vld [vmem:[%s353 + $0xd0] sm:$0xff]
        %v471 = vld [vmem:[%s353 + $0xd8] sm:$0xff]
        %v472 = vld [vmem:[%s353 + $0xe0] sm:$0xff]
        %v473 = vld [vmem:[%s353 + $0xe8] sm:$0xff]
        %v474 = vld [vmem:[%s353 + $0xf0] sm:$0xff]
        %v475 = vld [vmem:[%s353 + $0xf8] sm:$0xff]
        %v476 = vld [vmem:[%s364] sm:$0xff]
        %v477 = vld [vmem:[%s364 + $0x8] sm:$0xff]
        %v478 = vld [vmem:[%s364 + $0x10] sm:$0xff]
        %v479 = vld [vmem:[%s364 + $0x18] sm:$0xff]
        %v480 = vld [vmem:[%s364 + $0x20] sm:$0xff]
        %v481 = vld [vmem:[%s364 + $0x28] sm:$0xff]
        %v482 = vld [vmem:[%s364 + $0x30] sm:$0xff]
        %v483 = vld [vmem:[%s364 + $0x38] sm:$0xff]
        %v484 = vld [vmem:[%s364 + $0x40] sm:$0xff]
        %v485 = vld [vmem:[%s364 + $0x48] sm:$0xff]
        %v486 = vld [vmem:[%s364 + $0x50] sm:$0xff]
        %v487 = vld [vmem:[%s364 + $0x58] sm:$0xff]
        %v488 = vld [vmem:[%s364 + $0x60] sm:$0xff]
        %v489 = vld [vmem:[%s364 + $0x68] sm:$0xff]
        %v490 = vld [vmem:[%s364 + $0x70] sm:$0xff]
        %v491 = vld [vmem:[%s364 + $0x78] sm:$0xff]
        %v492 = vld [vmem:[%s364 + $0x80] sm:$0xff]
        %v493 = vld [vmem:[%s364 + $0x88] sm:$0xff]
        %v494 = vld [vmem:[%s364 + $0x90] sm:$0xff]
        %v495 = vld [vmem:[%s364 + $0x98] sm:$0xff]
        %v496 = vld [vmem:[%s364 + $0xa0] sm:$0xff]
        %v497 = vld [vmem:[%s364 + $0xa8] sm:$0xff]
        %v498 = vld [vmem:[%s364 + $0xb0] sm:$0xff]
        %v499 = vld [vmem:[%s364 + $0xb8] sm:$0xff]
        %v500 = vld [vmem:[%s364 + $0xc0] sm:$0xff]
        %v501 = vld [vmem:[%s364 + $0xc8] sm:$0xff]
        %v502 = vld [vmem:[%s364 + $0xd0] sm:$0xff]
        %v503 = vld [vmem:[%s364 + $0xd8] sm:$0xff]
        %v504 = vld [vmem:[%s364 + $0xe0] sm:$0xff]
        %v505 = vld [vmem:[%s364 + $0xe8] sm:$0xff]
        %v506 = vld [vmem:[%s364 + $0xf0] sm:$0xff]
        %v507 = vld [vmem:[%s364 + $0xf8] sm:$0xff]
        %508 = vmatprep.subr.mxu0 %v477
        %509 = vmatpush1.msra.mxu0 %v476
        %510 = vmatprep.subr.mxu0 %v479
        %511 = vmatpush1.msra.mxu0 %v478
        %512 = vmatprep.subr.mxu0 %v481
        %513 = vmatpush1.msra.mxu0 %v480
        %514 = vmatprep.subr.mxu0 %v483
        %515 = vmatpush1.msra.mxu0 %v482
        %516 = vmatprep.subr.mxu0 %v485
        %517 = vmatpush1.msra.mxu0 %v484
        %518 = vmatprep.subr.mxu0 %v487
        %519 = vmatpush1.msra.mxu0 %v486
        %520 = vmatprep.subr.mxu0 %v489
        %521 = vmatpush1.msra.mxu0 %v488
        %522 = vmatprep.subr.mxu0 %v491
        %523 = vmatpush1.msra.mxu0 %v490
        %524 = vmatprep.subr.mxu0 %v493
        %525 = vmatpush1.msra.mxu0 %v492
        %526 = vmatprep.subr.mxu0 %v495
        %527 = vmatpush1.msra.mxu0 %v494
        %528 = vmatprep.subr.mxu0 %v497
        %529 = vmatpush1.msra.mxu0 %v496
        %530 = vmatprep.subr.mxu0 %v499
        %531 = vmatpush1.msra.mxu0 %v498
        %532 = vmatprep.subr.mxu0 %v501
        %533 = vmatpush1.msra.mxu0 %v500
        %534 = vmatprep.subr.mxu0 %v503
        %535 = vmatpush1.msra.mxu0 %v502
        %536 = vmatprep.subr.mxu0 %v505
        %537 = vmatpush1.msra.mxu0 %v504
        %538 = vmatprep.subr.mxu0 %v507
        %539 = vmatpush1.msra.mxu0 %v506
        %540 = vmatprep.subr.mxu0 0.0
        %541 = vmatpush1.msra.mxu0 0.0
        %542 = vmatprep.subr.mxu0 0.0
        %543 = vmatpush1.msra.mxu0 0.0
        %544 = vmatprep.subr.mxu0 0.0
        %545 = vmatpush1.msra.mxu0 0.0
        %546 = vmatprep.subr.mxu0 0.0
        %547 = vmatpush1.msra.mxu0 0.0
        %548 = vmatprep.subr.mxu0 0.0
        %549 = vmatpush1.msra.mxu0 0.0
        %550 = vmatprep.subr.mxu0 0.0
        %551 = vmatpush1.msra.mxu0 0.0
        %552 = vmatprep.subr.mxu0 0.0
        %553 = vmatpush1.msra.mxu0 0.0
        %554 = vmatprep.subr.mxu0 0.0
        %555 = vmatpush1.msra.mxu0 0.0
        %556 = vmatprep.subr.mxu0 0.0
        %557 = vmatpush1.msra.mxu0 0.0
        %558 = vmatprep.subr.mxu0 0.0
        %559 = vmatpush1.msra.mxu0 0.0
        %560 = vmatprep.subr.mxu0 0.0
        %561 = vmatpush1.msra.mxu0 0.0
        %562 = vmatprep.subr.mxu0 0.0
        %563 = vmatpush1.msra.mxu0 0.0
        %564 = vmatprep.subr.mxu0 0.0
        %565 = vmatpush1.msra.mxu0 0.0
        %566 = vmatprep.subr.mxu0 0.0
        %567 = vmatpush1.msra.mxu0 0.0
        %568 = vmatprep.subr.mxu0 0.0
        %569 = vmatpush1.msra.mxu0 0.0
        %570 = vmatprep.subr.mxu0 0.0
        %571 = vmatpush1.msra.mxu0 0.0
        %572 = vmatprep.mubr.f32.mxu0 0.0
        %573 = vmatmul.mubr.f32.gmra.mrb[0].mxu0 %v444
        %v574 = vpop.f32.mrb[0].mxu0
        %v575 = vadd.f32 0.0, %v574
        %v576 = vpop.f32.mrb[0].mxu0
        %v577 = vadd.f32 0.0, %v576
        %578 = vmatprep.mubr.f32.mxu0 0.0
        %579 = vmatmul.mubr.f32.gmra.mrb[0].mxu0 %v445
        %v580 = vpop.f32.mrb[0].mxu0
        %v581 = vadd.f32 0.0, %v580
        %v582 = vpop.f32.mrb[0].mxu0
        %v583 = vadd.f32 0.0, %v582
        %584 = vmatprep.mubr.f32.mxu0 0.0
        %585 = vmatmul.mubr.f32.gmra.mrb[0].mxu0 %v446
        %v586 = vpop.f32.mrb[0].mxu0
        %v587 = vadd.f32 0.0, %v586
        %v588 = vpop.f32.mrb[0].mxu0
        %v589 = vadd.f32 0.0, %v588
        %590 = vmatprep.mubr.f32.mxu0 0.0
        %591 = vmatmul.mubr.f32.gmra.mrb[0].mxu0 %v447
        %v592 = vpop.f32.mrb[0].mxu0
        %v593 = vadd.f32 0.0, %v592
        %v594 = vpop.f32.mrb[0].mxu0
        %v595 = vadd.f32 0.0, %v594
        %596 = vmatprep.mubr.f32.mxu0 0.0
        %597 = vmatmul.mubr.f32.gmra.mrb[0].mxu0 %v448
        %v598 = vpop.f32.mrb[0].mxu0
        %v599 = vadd.f32 0.0, %v598
        %v600 = vpop.f32.mrb[0].mxu0
        %v601 = vadd.f32 0.0, %v600
        %602 = vmatprep.mubr.f32.mxu0 0.0
        %603 = vmatmul.mubr.f32.gmra.mrb[0].mxu0 %v449
        %v604 = vpop.f32.mrb[0].mxu0
        %v605 = vadd.f32 0.0, %v604
        %v606 = vpop.f32.mrb[0].mxu0
        %v607 = vadd.f32 0.0, %v606
        %608 = vmatprep.mubr.f32.mxu0 0.0
        %609 = vmatmul.mubr.f32.gmra.mrb[0].mxu0 %v450
        %v610 = vpop.f32.mrb[0].mxu0
        %v611 = vadd.f32 0.0, %v610
        %v612 = vpop.f32.mrb[0].mxu0
        %v613 = vadd.f32 0.0, %v612
        %614 = vmatprep.mubr.f32.mxu0 0.0
        %615 = vmatmul.mubr.f32.gmra.mrb[0].mxu0 %v451
        %v616 = vpop.f32.mrb[0].mxu0
        %v617 = vadd.f32 0.0, %v616
        %v618 = vpop.f32.mrb[0].mxu0
        %v619 = vadd.f32 0.0, %v618
        %620 = vmatprep.mubr.f32.mxu0 0.0
        %621 = vmatmul.mubr.f32.gmra.mrb[0].mxu0 %v452
        %v622 = vpop.f32.mrb[0].mxu0
        %v623 = vadd.f32 0.0, %v622
        %v624 = vpop.f32.mrb[0].mxu0
        %v625 = vadd.f32 0.0, %v624
        %626 = vmatprep.mubr.f32.mxu0 0.0
        %627 = vmatmul.mubr.f32.gmra.mrb[0].mxu0 %v453
        %v628 = vpop.f32.mrb[0].mxu0
        %v629 = vadd.f32 0.0, %v628
        %v630 = vpop.f32.mrb[0].mxu0
        %v631 = vadd.f32 0.0, %v630
        %632 = vmatprep.mubr.f32.mxu0 0.0
        %633 = vmatmul.mubr.f32.gmra.mrb[0].mxu0 %v454
        %v634 = vpop.f32.mrb[0].mxu0
        %v635 = vadd.f32 0.0, %v634
        %v636 = vpop.f32.mrb[0].mxu0
        %v637 = vadd.f32 0.0, %v636
        %638 = vmatprep.mubr.f32.mxu0 0.0
        %639 = vmatmul.mubr.f32.gmra.mrb[0].mxu0 %v455
        %v640 = vpop.f32.mrb[0].mxu0
        %v641 = vadd.f32 0.0, %v640
        %v642 = vpop.f32.mrb[0].mxu0
        %v643 = vadd.f32 0.0, %v642
        %644 = vmatprep.mubr.f32.mxu0 0.0
        %645 = vmatmul.mubr.f32.gmra.mrb[0].mxu0 %v456
        %v646 = vpop.f32.mrb[0].mxu0
        %v647 = vadd.f32 0.0, %v646
        %v648 = vpop.f32.mrb[0].mxu0
        %v649 = vadd.f32 0.0, %v648
        %650 = vmatprep.mubr.f32.mxu0 0.0
        %651 = vmatmul.mubr.f32.gmra.mrb[0].mxu0 %v457
        %v652 = vpop.f32.mrb[0].mxu0
        %v653 = vadd.f32 0.0, %v652
        %v654 = vpop.f32.mrb[0].mxu0
        %v655 = vadd.f32 0.0, %v654
        %656 = vmatprep.mubr.f32.mxu0 0.0
        %657 = vmatmul.mubr.f32.gmra.mrb[0].mxu0 %v458
        %v658 = vpop.f32.mrb[0].mxu0
        %v659 = vadd.f32 0.0, %v658
        %v660 = vpop.f32.mrb[0].mxu0
        %v661 = vadd.f32 0.0, %v660
        %662 = vmatprep.mubr.f32.mxu0 0.0
        %663 = vmatmul.mubr.f32.gmra.mrb[0].mxu0 %v459
        %v664 = vpop.f32.mrb[0].mxu0
        %v665 = vadd.f32 0.0, %v664
        %v666 = vpop.f32.mrb[0].mxu0
        %v667 = vadd.f32 0.0, %v666
        %668 = vmatprep.mubr.f32.mxu0 0.0
        %669 = vmatmul.mubr.f32.gmra.mrb[0].mxu0 %v460
        %v670 = vpop.f32.mrb[0].mxu0
        %v671 = vadd.f32 0.0, %v670
        %v672 = vpop.f32.mrb[0].mxu0
        %v673 = vadd.f32 0.0, %v672
        %674 = vmatprep.mubr.f32.mxu0 0.0
        %675 = vmatmul.mubr.f32.gmra.mrb[0].mxu0 %v461
        %v676 = vpop.f32.mrb[0].mxu0
        %v677 = vadd.f32 0.0, %v676
        %v678 = vpop.f32.mrb[0].mxu0
        %v679 = vadd.f32 0.0, %v678
        %680 = vmatprep.mubr.f32.mxu0 0.0
        %681 = vmatmul.mubr.f32.gmra.mrb[0].mxu0 %v462
        %v682 = vpop.f32.mrb[0].mxu0
        %v683 = vadd.f32 0.0, %v682
        %v684 = vpop.f32.mrb[0].mxu0
        %v685 = vadd.f32 0.0, %v684
        %686 = vmatprep.mubr.f32.mxu0 0.0
        %687 = vmatmul.mubr.f32.gmra.mrb[0].mxu0 %v463
        %v688 = vpop.f32.mrb[0].mxu0
        %v689 = vadd.f32 0.0, %v688
        %v690 = vpop.f32.mrb[0].mxu0
        %v691 = vadd.f32 0.0, %v690
        %692 = vmatprep.mubr.f32.mxu0 0.0
        %693 = vmatmul.mubr.f32.gmra.mrb[0].mxu0 %v464
        %v694 = vpop.f32.mrb[0].mxu0
        %v695 = vadd.f32 0.0, %v694
        %v696 = vpop.f32.mrb[0].mxu0
        %v697 = vadd.f32 0.0, %v696
        %698 = vmatprep.mubr.f32.mxu0 0.0
        %699 = vmatmul.mubr.f32.gmra.mrb[0].mxu0 %v465
        %v700 = vpop.f32.mrb[0].mxu0
        %v701 = vadd.f32 0.0, %v700
        %v702 = vpop.f32.mrb[0].mxu0
        %v703 = vadd.f32 0.0, %v702
        %704 = vmatprep.mubr.f32.mxu0 0.0
        %705 = vmatmul.mubr.f32.gmra.mrb[0].mxu0 %v466
        %v706 = vpop.f32.mrb[0].mxu0
        %v707 = vadd.f32 0.0, %v706
        %v708 = vpop.f32.mrb[0].mxu0
        %v709 = vadd.f32 0.0, %v708
        %710 = vmatprep.mubr.f32.mxu0 0.0
        %711 = vmatmul.mubr.f32.gmra.mrb[0].mxu0 %v467
        %v712 = vpop.f32.mrb[0].mxu0
        %v713 = vadd.f32 0.0, %v712
        %v714 = vpop.f32.mrb[0].mxu0
        %v715 = vadd.f32 0.0, %v714
        %716 = vmatprep.mubr.f32.mxu0 0.0
        %717 = vmatmul.mubr.f32.gmra.mrb[0].mxu0 %v468
        %v718 = vpop.f32.mrb[0].mxu0
        %v719 = vadd.f32 0.0, %v718
        %v720 = vpop.f32.mrb[0].mxu0
        %v721 = vadd.f32 0.0, %v720
        %722 = vmatprep.mubr.f32.mxu0 0.0
        %723 = vmatmul.mubr.f32.gmra.mrb[0].mxu0 %v469
        %v724 = vpop.f32.mrb[0].mxu0
        %v725 = vadd.f32 0.0, %v724
        %v726 = vpop.f32.mrb[0].mxu0
        %v727 = vadd.f32 0.0, %v726
        %728 = vmatprep.mubr.f32.mxu0 0.0
        %729 = vmatmul.mubr.f32.gmra.mrb[0].mxu0 %v470
        %v730 = vpop.f32.mrb[0].mxu0
        %v731 = vadd.f32 0.0, %v730
        %v732 = vpop.f32.mrb[0].mxu0
        %v733 = vadd.f32 0.0, %v732
        %734 = vmatprep.mubr.f32.mxu0 0.0
        %735 = vmatmul.mubr.f32.gmra.mrb[0].mxu0 %v471
        %v736 = vpop.f32.mrb[0].mxu0
        %v737 = vadd.f32 0.0, %v736
        %v738 = vpop.f32.mrb[0].mxu0
        %v739 = vadd.f32 0.0, %v738
        %740 = vmatprep.mubr.f32.mxu0 0.0
        %741 = vmatmul.mubr.f32.gmra.mrb[0].mxu0 %v472
        %v742 = vpop.f32.mrb[0].mxu0
        %v743 = vadd.f32 0.0, %v742
        %v744 = vpop.f32.mrb[0].mxu0
        %v745 = vadd.f32 0.0, %v744
        %746 = vmatprep.mubr.f32.mxu0 0.0
        %747 = vmatmul.mubr.f32.gmra.mrb[0].mxu0 %v473
        %v748 = vpop.f32.mrb[0].mxu0
        %v749 = vadd.f32 0.0, %v748
        %v750 = vpop.f32.mrb[0].mxu0
        %v751 = vadd.f32 0.0, %v750
        %752 = vmatprep.mubr.f32.mxu0 0.0
        %753 = vmatmul.mubr.f32.gmra.mrb[0].mxu0 %v474
        %v754 = vpop.f32.mrb[0].mxu0
        %v755 = vadd.f32 0.0, %v754
        %v756 = vpop.f32.mrb[0].mxu0
        %v757 = vadd.f32 0.0, %v756
        %758 = vmatprep.mubr.f32.mxu0 0.0
        %759 = vmatmul.mubr.f32.gmra.mrb[0].mxu0 %v475
        %v760 = vpop.f32.mrb[0].mxu0
        %v761 = vadd.f32 0.0, %v760
        %v762 = vpop.f32.mrb[0].mxu0
        %v763 = vadd.f32 0.0, %v762
        %764 = vdwg.mxu0
        %v765 = vld [vmem:[%s376] sm:$0xff]
        %v766 = vld [vmem:[%s376 + $0x8] sm:$0xff]
        %v767 = vld [vmem:[%s376 + $0x10] sm:$0xff]
        %v768 = vld [vmem:[%s376 + $0x18] sm:$0xff]
        %v769 = vld [vmem:[%s376 + $0x20] sm:$0xff]
        %v770 = vld [vmem:[%s376 + $0x28] sm:$0xff]
        %v771 = vld [vmem:[%s376 + $0x30] sm:$0xff]
        %v772 = vld [vmem:[%s376 + $0x38] sm:$0xff]
        %v773 = vld [vmem:[%s376 + $0x40] sm:$0xff]
        %v774 = vld [vmem:[%s376 + $0x48] sm:$0xff]
        %v775 = vld [vmem:[%s376 + $0x50] sm:$0xff]
        %v776 = vld [vmem:[%s376 + $0x58] sm:$0xff]
        %v777 = vld [vmem:[%s376 + $0x60] sm:$0xff]
        %v778 = vld [vmem:[%s376 + $0x68] sm:$0xff]
        %v779 = vld [vmem:[%s376 + $0x70] sm:$0xff]
        %v780 = vld [vmem:[%s376 + $0x78] sm:$0xff]
        %v781 = vld [vmem:[%s376 + $0x80] sm:$0xff]
        %v782 = vld [vmem:[%s376 + $0x88] sm:$0xff]
        %v783 = vld [vmem:[%s376 + $0x90] sm:$0xff]
        %v784 = vld [vmem:[%s376 + $0x98] sm:$0xff]
        %v785 = vld [vmem:[%s376 + $0xa0] sm:$0xff]
        %v786 = vld [vmem:[%s376 + $0xa8] sm:$0xff]
        %v787 = vld [vmem:[%s376 + $0xb0] sm:$0xff]
        %v788 = vld [vmem:[%s376 + $0xb8] sm:$0xff]
        %v789 = vld [vmem:[%s376 + $0xc0] sm:$0xff]
        %v790 = vld [vmem:[%s376 + $0xc8] sm:$0xff]
        %v791 = vld [vmem:[%s376 + $0xd0] sm:$0xff]
        %v792 = vld [vmem:[%s376 + $0xd8] sm:$0xff]
        %v793 = vld [vmem:[%s376 + $0xe0] sm:$0xff]
        %v794 = vld [vmem:[%s376 + $0xe8] sm:$0xff]
        %v795 = vld [vmem:[%s376 + $0xf0] sm:$0xff]
        %v796 = vld [vmem:[%s376 + $0xf8] sm:$0xff]
        %797 = vmatprep.subr.mxu0 %v766
        %798 = vmatpush1.msra.mxu0 %v765
        %799 = vmatprep.subr.mxu0 %v768
        %800 = vmatpush1.msra.mxu0 %v767
        %801 = vmatprep.subr.mxu0 %v770
        %802 = vmatpush1.msra.mxu0 %v769
        %803 = vmatprep.subr.mxu0 %v772
        %804 = vmatpush1.msra.mxu0 %v771
        %805 = vmatprep.subr.mxu0 %v774
        %806 = vmatpush1.msra.mxu0 %v773
        %807 = vmatprep.subr.mxu0 %v776
        %808 = vmatpush1.msra.mxu0 %v775
        %809 = vmatprep.subr.mxu0 %v778
        %810 = vmatpush1.msra.mxu0 %v777
        %811 = vmatprep.subr.mxu0 %v780
        %812 = vmatpush1.msra.mxu0 %v779
        %813 = vmatprep.subr.mxu0 %v782
        %814 = vmatpush1.msra.mxu0 %v781
        %815 = vmatprep.subr.mxu0 %v784
        %816 = vmatpush1.msra.mxu0 %v783
        %817 = vmatprep.subr.mxu0 %v786
        %818 = vmatpush1.msra.mxu0 %v785
        %819 = vmatprep.subr.mxu0 %v788
        %820 = vmatpush1.msra.mxu0 %v787
        %821 = vmatprep.subr.mxu0 %v790
        %822 = vmatpush1.msra.mxu0 %v789
        %823 = vmatprep.subr.mxu0 %v792
        %824 = vmatpush1.msra.mxu0 %v791
        %825 = vmatprep.subr.mxu0 %v794
        %826 = vmatpush1.msra.mxu0 %v793
        %827 = vmatprep.subr.mxu0 %v796
        %828 = vmatpush1.msra.mxu0 %v795
        %829 = vmatprep.subr.mxu0 0.0
        %830 = vmatpush1.msra.mxu0 0.0
        %831 = vmatprep.subr.mxu0 0.0
        %832 = vmatpush1.msra.mxu0 0.0
        %833 = vmatprep.subr.mxu0 0.0
        %834 = vmatpush1.msra.mxu0 0.0
        %835 = vmatprep.subr.mxu0 0.0
        %836 = vmatpush1.msra.mxu0 0.0
        %837 = vmatprep.subr.mxu0 0.0
        %838 = vmatpush1.msra.mxu0 0.0
        %839 = vmatprep.subr.mxu0 0.0
        %840 = vmatpush1.msra.mxu0 0.0
        %841 = vmatprep.subr.mxu0 0.0
        %842 = vmatpush1.msra.mxu0 0.0
        %843 = vmatprep.subr.mxu0 0.0
        %844 = vmatpush1.msra.mxu0 0.0
        %845 = vmatprep.subr.mxu0 0.0
        %846 = vmatpush1.msra.mxu0 0.0
        %847 = vmatprep.subr.mxu0 0.0
        %848 = vmatpush1.msra.mxu0 0.0
        %849 = vmatprep.subr.mxu0 0.0
        %850 = vmatpush1.msra.mxu0 0.0
        %851 = vmatprep.subr.mxu0 0.0
        %852 = vmatpush1.msra.mxu0 0.0
        %853 = vmatprep.subr.mxu0 0.0
        %854 = vmatpush1.msra.mxu0 0.0
        %855 = vmatprep.subr.mxu0 0.0
        %856 = vmatpush1.msra.mxu0 0.0
        %857 = vmatprep.subr.mxu0 0.0
        %858 = vmatpush1.msra.mxu0 0.0
        %859 = vmatprep.subr.mxu0 0.0
        %860 = vmatpush1.msra.mxu0 0.0
        %861 = vmatprep.mubr.f32.mxu0 0.0
        %862 = vmatmul.mubr.f32.gmra.mrb[0].mxu0 %v444
        %v863 = vpop.f32.mrb[0].mxu0
        %v864 = vadd.f32 0.0, %v863
        %v865 = vpop.f32.mrb[0].mxu0
        %v866 = vadd.f32 0.0, %v865
        %867 = vmatprep.mubr.f32.mxu0 0.0
        %868 = vmatmul.mubr.f32.gmra.mrb[0].mxu0 %v445
        %v869 = vpop.f32.mrb[0].mxu0
        %v870 = vadd.f32 0.0, %v869
        %v871 = vpop.f32.mrb[0].mxu0
        %v872 = vadd.f32 0.0, %v871
        %873 = vmatprep.mubr.f32.mxu0 0.0
        %874 = vmatmul.mubr.f32.gmra.mrb[0].mxu0 %v446
        %v875 = vpop.f32.mrb[0].mxu0
        %v876 = vadd.f32 0.0, %v875
        %v877 = vpop.f32.mrb[0].mxu0
        %v878 = vadd.f32 0.0, %v877
        %879 = vmatprep.mubr.f32.mxu0 0.0
        %880 = vmatmul.mubr.f32.gmra.mrb[0].mxu0 %v447
        %v881 = vpop.f32.mrb[0].mxu0
        %v882 = vadd.f32 0.0, %v881
        %v883 = vpop.f32.mrb[0].mxu0
        %v884 = vadd.f32 0.0, %v883
        %885 = vmatprep.mubr.f32.mxu0 0.0
        %886 = vmatmul.mubr.f32.gmra.mrb[0].mxu0 %v448
        %v887 = vpop.f32.mrb[0].mxu0
        %v888 = vadd.f32 0.0, %v887
        %v889 = vpop.f32.mrb[0].mxu0
        %v890 = vadd.f32 0.0, %v889
        %891 = vmatprep.mubr.f32.mxu0 0.0
        %892 = vmatmul.mubr.f32.gmra.mrb[0].mxu0 %v449
        %v893 = vpop.f32.mrb[0].mxu0
        %v894 = vadd.f32 0.0, %v893
        %v895 = vpop.f32.mrb[0].mxu0
        %v896 = vadd.f32 0.0, %v895
        %897 = vmatprep.mubr.f32.mxu0 0.0
        %898 = vmatmul.mubr.f32.gmra.mrb[0].mxu0 %v450
        %v899 = vpop.f32.mrb[0].mxu0
        %v900 = vadd.f32 0.0, %v899
        %v901 = vpop.f32.mrb[0].mxu0
        %v902 = vadd.f32 0.0, %v901
        %903 = vmatprep.mubr.f32.mxu0 0.0
        %904 = vmatmul.mubr.f32.gmra.mrb[0].mxu0 %v451
        %v905 = vpop.f32.mrb[0].mxu0
        %v906 = vadd.f32 0.0, %v905
        %v907 = vpop.f32.mrb[0].mxu0
        %v908 = vadd.f32 0.0, %v907
        %909 = vmatprep.mubr.f32.mxu0 0.0
        %910 = vmatmul.mubr.f32.gmra.mrb[0].mxu0 %v452
        %v911 = vpop.f32.mrb[0].mxu0
        %v912 = vadd.f32 0.0, %v911
        %v913 = vpop.f32.mrb[0].mxu0
        %v914 = vadd.f32 0.0, %v913
        %915 = vmatprep.mubr.f32.mxu0 0.0
        %916 = vmatmul.mubr.f32.gmra.mrb[0].mxu0 %v453
        %v917 = vpop.f32.mrb[0].mxu0
        %v918 = vadd.f32 0.0, %v917
        %v919 = vpop.f32.mrb[0].mxu0
        %v920 = vadd.f32 0.0, %v919
        %921 = vmatprep.mubr.f32.mxu0 0.0
        %922 = vmatmul.mubr.f32.gmra.mrb[0].mxu0 %v454
        %v923 = vpop.f32.mrb[0].mxu0
        %v924 = vadd.f32 0.0, %v923
        %v925 = vpop.f32.mrb[0].mxu0
        %v926 = vadd.f32 0.0, %v925
        %927 = vmatprep.mubr.f32.mxu0 0.0
        %928 = vmatmul.mubr.f32.gmra.mrb[0].mxu0 %v455
        %v929 = vpop.f32.mrb[0].mxu0
        %v930 = vadd.f32 0.0, %v929
        %v931 = vpop.f32.mrb[0].mxu0
        %v932 = vadd.f32 0.0, %v931
        %933 = vmatprep.mubr.f32.mxu0 0.0
        %934 = vmatmul.mubr.f32.gmra.mrb[0].mxu0 %v456
        %v935 = vpop.f32.mrb[0].mxu0
        %v936 = vadd.f32 0.0, %v935
        %v937 = vpop.f32.mrb[0].mxu0
        %v938 = vadd.f32 0.0, %v937
        %939 = vmatprep.mubr.f32.mxu0 0.0
        %940 = vmatmul.mubr.f32.gmra.mrb[0].mxu0 %v457
        %v941 = vpop.f32.mrb[0].mxu0
        %v942 = vadd.f32 0.0, %v941
        %v943 = vpop.f32.mrb[0].mxu0
        %v944 = vadd.f32 0.0, %v943
        %945 = vmatprep.mubr.f32.mxu0 0.0
        %946 = vmatmul.mubr.f32.gmra.mrb[0].mxu0 %v458
        %v947 = vpop.f32.mrb[0].mxu0
        %v948 = vadd.f32 0.0, %v947
        %v949 = vpop.f32.mrb[0].mxu0
        %v950 = vadd.f32 0.0, %v949
        %951 = vmatprep.mubr.f32.mxu0 0.0
        %952 = vmatmul.mubr.f32.gmra.mrb[0].mxu0 %v459
        %v953 = vpop.f32.mrb[0].mxu0
        %v954 = vadd.f32 0.0, %v953
        %v955 = vpop.f32.mrb[0].mxu0
        %v956 = vadd.f32 0.0, %v955
        %957 = vmatprep.mubr.f32.mxu0 0.0
        %958 = vmatmul.mubr.f32.gmra.mrb[0].mxu0 %v460
        %v959 = vpop.f32.mrb[0].mxu0
        %v960 = vadd.f32 0.0, %v959
        %v961 = vpop.f32.mrb[0].mxu0
        %v962 = vadd.f32 0.0, %v961
        %963 = vmatprep.mubr.f32.mxu0 0.0
        %964 = vmatmul.mubr.f32.gmra.mrb[0].mxu0 %v461
        %v965 = vpop.f32.mrb[0].mxu0
        %v966 = vadd.f32 0.0, %v965
        %v967 = vpop.f32.mrb[0].mxu0
        %v968 = vadd.f32 0.0, %v967
        %969 = vmatprep.mubr.f32.mxu0 0.0
        %970 = vmatmul.mubr.f32.gmra.mrb[0].mxu0 %v462
        %v971 = vpop.f32.mrb[0].mxu0
        %v972 = vadd.f32 0.0, %v971
        %v973 = vpop.f32.mrb[0].mxu0
        %v974 = vadd.f32 0.0, %v973
        %975 = vmatprep.mubr.f32.mxu0 0.0
        %976 = vmatmul.mubr.f32.gmra.mrb[0].mxu0 %v463
        %v977 = vpop.f32.mrb[0].mxu0
        %v978 = vadd.f32 0.0, %v977
        %v979 = vpop.f32.mrb[0].mxu0
        %v980 = vadd.f32 0.0, %v979
        %981 = vmatprep.mubr.f32.mxu0 0.0
        %982 = vmatmul.mubr.f32.gmra.mrb[0].mxu0 %v464
        %v983 = vpop.f32.mrb[0].mxu0
        %v984 = vadd.f32 0.0, %v983
        %v985 = vpop.f32.mrb[0].mxu0
        %v986 = vadd.f32 0.0, %v985
        %987 = vmatprep.mubr.f32.mxu0 0.0
        %988 = vmatmul.mubr.f32.gmra.mrb[0].mxu0 %v465
        %v989 = vpop.f32.mrb[0].mxu0
        %v990 = vadd.f32 0.0, %v989
        %v991 = vpop.f32.mrb[0].mxu0
        %v992 = vadd.f32 0.0, %v991
        %993 = vmatprep.mubr.f32.mxu0 0.0
        %994 = vmatmul.mubr.f32.gmra.mrb[0].mxu0 %v466
        %v995 = vpop.f32.mrb[0].mxu0
        %v996 = vadd.f32 0.0, %v995
        %v997 = vpop.f32.mrb[0].mxu0
        %v998 = vadd.f32 0.0, %v997
        %999 = vmatprep.mubr.f32.mxu0 0.0
        %1000 = vmatmul.mubr.f32.gmra.mrb[0].mxu0 %v467
        %v1001 = vpop.f32.mrb[0].mxu0
        %v1002 = vadd.f32 0.0, %v1001
        %v1003 = vpop.f32.mrb[0].mxu0
        %v1004 = vadd.f32 0.0, %v1003
        %1005 = vmatprep.mubr.f32.mxu0 0.0
        %1006 = vmatmul.mubr.f32.gmra.mrb[0].mxu0 %v468
        %v1007 = vpop.f32.mrb[0].mxu0
        %v1008 = vadd.f32 0.0, %v1007
        %v1009 = vpop.f32.mrb[0].mxu0
        %v1010 = vadd.f32 0.0, %v1009
        %1011 = vmatprep.mubr.f32.mxu0 0.0
        %1012 = vmatmul.mubr.f32.gmra.mrb[0].mxu0 %v469
        %v1013 = vpop.f32.mrb[0].mxu0
        %v1014 = vadd.f32 0.0, %v1013
        %v1015 = vpop.f32.mrb[0].mxu0
        %v1016 = vadd.f32 0.0, %v1015
        %1017 = vmatprep.mubr.f32.mxu0 0.0
        %1018 = vmatmul.mubr.f32.gmra.mrb[0].mxu0 %v470
        %v1019 = vpop.f32.mrb[0].mxu0
        %v1020 = vadd.f32 0.0, %v1019
        %v1021 = vpop.f32.mrb[0].mxu0
        %v1022 = vadd.f32 0.0, %v1021
        %1023 = vmatprep.mubr.f32.mxu0 0.0
        %1024 = vmatmul.mubr.f32.gmra.mrb[0].mxu0 %v471
        %v1025 = vpop.f32.mrb[0].mxu0
        %v1026 = vadd.f32 0.0, %v1025
        %v1027 = vpop.f32.mrb[0].mxu0
        %v1028 = vadd.f32 0.0, %v1027
        %1029 = vmatprep.mubr.f32.mxu0 0.0
        %1030 = vmatmul.mubr.f32.gmra.mrb[0].mxu0 %v472
        %v1031 = vpop.f32.mrb[0].mxu0
        %v1032 = vadd.f32 0.0, %v1031
        %v1033 = vpop.f32.mrb[0].mxu0
        %v1034 = vadd.f32 0.0, %v1033
        %1035 = vmatprep.mubr.f32.mxu0 0.0
        %1036 = vmatmul.mubr.f32.gmra.mrb[0].mxu0 %v473
        %v1037 = vpop.f32.mrb[0].mxu0
        %v1038 = vadd.f32 0.0, %v1037
        %v1039 = vpop.f32.mrb[0].mxu0
        %v1040 = vadd.f32 0.0, %v1039
        %1041 = vmatprep.mubr.f32.mxu0 0.0
        %1042 = vmatmul.mubr.f32.gmra.mrb[0].mxu0 %v474
        %v1043 = vpop.f32.mrb[0].mxu0
        %v1044 = vadd.f32 0.0, %v1043
        %v1045 = vpop.f32.mrb[0].mxu0
        %v1046 = vadd.f32 0.0, %v1045
        %1047 = vmatprep.mubr.f32.mxu0 0.0
        %1048 = vmatmul.mubr.f32.gmra.mrb[0].mxu0 %v475
        %v1049 = vpop.f32.mrb[0].mxu0
        %v1050 = vadd.f32 0.0, %v1049
        %v1051 = vpop.f32.mrb[0].mxu0
        %v1052 = vadd.f32 0.0, %v1051
        %1053 = vdwg.mxu0
        %v1054 = vxor.u32 %v575, 2147483648
        %v1055 = vxor.u32 %v577, 2147483648
        %v1056 = vxor.u32 %v581, 2147483648
        %v1057 = vxor.u32 %v583, 2147483648
        %v1058 = vxor.u32 %v587, 2147483648
        %v1059 = vxor.u32 %v589, 2147483648
        %v1060 = vxor.u32 %v593, 2147483648
        %v1061 = vxor.u32 %v595, 2147483648
        %v1062 = vxor.u32 %v599, 2147483648
        %v1063 = vxor.u32 %v601, 2147483648
        %v1064 = vxor.u32 %v605, 2147483648
        %v1065 = vxor.u32 %v607, 2147483648
        %v1066 = vxor.u32 %v611, 2147483648
        %v1067 = vxor.u32 %v613, 2147483648
        %v1068 = vxor.u32 %v617, 2147483648
        %v1069 = vxor.u32 %v619, 2147483648
        %v1070 = vxor.u32 %v623, 2147483648
        %v1071 = vxor.u32 %v625, 2147483648
        %v1072 = vxor.u32 %v629, 2147483648
        %v1073 = vxor.u32 %v631, 2147483648
        %v1074 = vxor.u32 %v635, 2147483648
        %v1075 = vxor.u32 %v637, 2147483648
        %v1076 = vxor.u32 %v641, 2147483648
        %v1077 = vxor.u32 %v643, 2147483648
        %v1078 = vxor.u32 %v647, 2147483648
        %v1079 = vxor.u32 %v649, 2147483648
        %v1080 = vxor.u32 %v653, 2147483648
        %v1081 = vxor.u32 %v655, 2147483648
        %v1082 = vxor.u32 %v659, 2147483648
        %v1083 = vxor.u32 %v661, 2147483648
        %v1084 = vxor.u32 %v665, 2147483648
        %v1085 = vxor.u32 %v667, 2147483648
        %v1086 = vxor.u32 %v671, 2147483648
        %v1087 = vxor.u32 %v673, 2147483648
        %v1088 = vxor.u32 %v677, 2147483648
        %v1089 = vxor.u32 %v679, 2147483648
        %v1090 = vxor.u32 %v683, 2147483648
        %v1091 = vxor.u32 %v685, 2147483648
        %v1092 = vxor.u32 %v689, 2147483648
        %v1093 = vxor.u32 %v691, 2147483648
        %v1094 = vxor.u32 %v695, 2147483648
        %v1095 = vxor.u32 %v697, 2147483648
        %v1096 = vxor.u32 %v701, 2147483648
        %v1097 = vxor.u32 %v703, 2147483648
        %v1098 = vxor.u32 %v707, 2147483648
        %v1099 = vxor.u32 %v709, 2147483648
        %v1100 = vxor.u32 %v713, 2147483648
        %v1101 = vxor.u32 %v715, 2147483648
        %v1102 = vxor.u32 %v719, 2147483648
        %v1103 = vxor.u32 %v721, 2147483648
        %v1104 = vxor.u32 %v725, 2147483648
        %v1105 = vxor.u32 %v727, 2147483648
        %v1106 = vxor.u32 %v731, 2147483648
        %v1107 = vxor.u32 %v733, 2147483648
        %v1108 = vxor.u32 %v737, 2147483648
        %v1109 = vxor.u32 %v739, 2147483648
        %v1110 = vxor.u32 %v743, 2147483648
        %v1111 = vxor.u32 %v745, 2147483648
        %v1112 = vxor.u32 %v749, 2147483648
        %v1113 = vxor.u32 %v751, 2147483648
        %v1114 = vxor.u32 %v755, 2147483648
        %v1115 = vxor.u32 %v757, 2147483648
        %v1116 = vxor.u32 %v761, 2147483648
        %v1117 = vxor.u32 %v763, 2147483648
        %v1118 = vmul.f32 %v1054, 1.442695
        %v1119 = vpow.pop %v1118
        %v1120 = vmul.f32 %v1055, 1.442695
        %v1121 = vpow.pop %v1120
        %v1122 = vmul.f32 %v1056, 1.442695
        %v1123 = vpow.pop %v1122
        %v1124 = vmul.f32 %v1057, 1.442695
        %v1125 = vpow.pop %v1124
        %v1126 = vmul.f32 %v1058, 1.442695
        %v1127 = vpow.pop %v1126
        %v1128 = vmul.f32 %v1059, 1.442695
        %v1129 = vpow.pop %v1128
        %v1130 = vmul.f32 %v1060, 1.442695
        %v1131 = vpow.pop %v1130
        %v1132 = vmul.f32 %v1061, 1.442695
        %v1133 = vpow.pop %v1132
        %v1134 = vmul.f32 %v1062, 1.442695
        %v1135 = vpow.pop %v1134
        %v1136 = vmul.f32 %v1063, 1.442695
        %v1137 = vpow.pop %v1136
        %v1138 = vmul.f32 %v1064, 1.442695
        %v1139 = vpow.pop %v1138
        %v1140 = vmul.f32 %v1065, 1.442695
        %v1141 = vpow.pop %v1140
        %v1142 = vmul.f32 %v1066, 1.442695
        %v1143 = vpow.pop %v1142
        %v1144 = vmul.f32 %v1067, 1.442695
        %v1145 = vpow.pop %v1144
        %v1146 = vmul.f32 %v1068, 1.442695
        %v1147 = vpow.pop %v1146
        %v1148 = vmul.f32 %v1069, 1.442695
        %v1149 = vpow.pop %v1148
        %v1150 = vmul.f32 %v1070, 1.442695
        %v1151 = vpow.pop %v1150
        %v1152 = vmul.f32 %v1071, 1.442695
        %v1153 = vpow.pop %v1152
        %v1154 = vmul.f32 %v1072, 1.442695
        %v1155 = vpow.pop %v1154
        %v1156 = vmul.f32 %v1073, 1.442695
        %v1157 = vpow.pop %v1156
        %v1158 = vmul.f32 %v1074, 1.442695
        %v1159 = vpow.pop %v1158
        %v1160 = vmul.f32 %v1075, 1.442695
        %v1161 = vpow.pop %v1160
        %v1162 = vmul.f32 %v1076, 1.442695
        %v1163 = vpow.pop %v1162
        %v1164 = vmul.f32 %v1077, 1.442695
        %v1165 = vpow.pop %v1164
        %v1166 = vmul.f32 %v1078, 1.442695
        %v1167 = vpow.pop %v1166
        %v1168 = vmul.f32 %v1079, 1.442695
        %v1169 = vpow.pop %v1168
        %v1170 = vmul.f32 %v1080, 1.442695
        %v1171 = vpow.pop %v1170
        %v1172 = vmul.f32 %v1081, 1.442695
        %v1173 = vpow.pop %v1172
        %v1174 = vmul.f32 %v1082, 1.442695
        %v1175 = vpow.pop %v1174
        %v1176 = vmul.f32 %v1083, 1.442695
        %v1177 = vpow.pop %v1176
        %v1178 = vmul.f32 %v1084, 1.442695
        %v1179 = vpow.pop %v1178
        %v1180 = vmul.f32 %v1085, 1.442695
        %v1181 = vpow.pop %v1180
        %v1182 = vmul.f32 %v1086, 1.442695
        %v1183 = vpow.pop %v1182
        %v1184 = vmul.f32 %v1087, 1.442695
        %v1185 = vpow.pop %v1184
        %v1186 = vmul.f32 %v1088, 1.442695
        %v1187 = vpow.pop %v1186
        %v1188 = vmul.f32 %v1089, 1.442695
        %v1189 = vpow.pop %v1188
        %v1190 = vmul.f32 %v1090, 1.442695
        %v1191 = vpow.pop %v1190
        %v1192 = vmul.f32 %v1091, 1.442695
        %v1193 = vpow.pop %v1192
        %v1194 = vmul.f32 %v1092, 1.442695
        %v1195 = vpow.pop %v1194
        %v1196 = vmul.f32 %v1093, 1.442695
        %v1197 = vpow.pop %v1196
        %v1198 = vmul.f32 %v1094, 1.442695
        %v1199 = vpow.pop %v1198
        %v1200 = vmul.f32 %v1095, 1.442695
        %v1201 = vpow.pop %v1200
        %v1202 = vmul.f32 %v1096, 1.442695
        %v1203 = vpow.pop %v1202
        %v1204 = vmul.f32 %v1097, 1.442695
        %v1205 = vpow.pop %v1204
        %v1206 = vmul.f32 %v1098, 1.442695
        %v1207 = vpow.pop %v1206
        %v1208 = vmul.f32 %v1099, 1.442695
        %v1209 = vpow.pop %v1208
        %v1210 = vmul.f32 %v1100, 1.442695
        %v1211 = vpow.pop %v1210
        %v1212 = vmul.f32 %v1101, 1.442695
        %v1213 = vpow.pop %v1212
        %v1214 = vmul.f32 %v1102, 1.442695
        %v1215 = vpow.pop %v1214
        %v1216 = vmul.f32 %v1103, 1.442695
        %v1217 = vpow.pop %v1216
        %v1218 = vmul.f32 %v1104, 1.442695
        %v1219 = vpow.pop %v1218
        %v1220 = vmul.f32 %v1105, 1.442695
        %v1221 = vpow.pop %v1220
        %v1222 = vmul.f32 %v1106, 1.442695
        %v1223 = vpow.pop %v1222
        %v1224 = vmul.f32 %v1107, 1.442695
        %v1225 = vpow.pop %v1224
        %v1226 = vmul.f32 %v1108, 1.442695
        %v1227 = vpow.pop %v1226
        %v1228 = vmul.f32 %v1109, 1.442695
        %v1229 = vpow.pop %v1228
        %v1230 = vmul.f32 %v1110, 1.442695
        %v1231 = vpow.pop %v1230
        %v1232 = vmul.f32 %v1111, 1.442695
        %v1233 = vpow.pop %v1232
        %v1234 = vmul.f32 %v1112, 1.442695
        %v1235 = vpow.pop %v1234
        %v1236 = vmul.f32 %v1113, 1.442695
        %v1237 = vpow.pop %v1236
        %v1238 = vmul.f32 %v1114, 1.442695
        %v1239 = vpow.pop %v1238
        %v1240 = vmul.f32 %v1115, 1.442695
        %v1241 = vpow.pop %v1240
        %v1242 = vmul.f32 %v1116, 1.442695
        %v1243 = vpow.pop %v1242
        %v1244 = vmul.f32 %v1117, 1.442695
        %v1245 = vpow.pop %v1244
        %v1246 = vadd.f32 %v1119, 1.0
        %v1247 = vadd.f32 %v1121, 1.0
        %v1248 = vadd.f32 %v1123, 1.0
        %v1249 = vadd.f32 %v1125, 1.0
        %v1250 = vadd.f32 %v1127, 1.0
        %v1251 = vadd.f32 %v1129, 1.0
        %v1252 = vadd.f32 %v1131, 1.0
        %v1253 = vadd.f32 %v1133, 1.0
        %v1254 = vadd.f32 %v1135, 1.0
        %v1255 = vadd.f32 %v1137, 1.0
        %v1256 = vadd.f32 %v1139, 1.0
        %v1257 = vadd.f32 %v1141, 1.0
        %v1258 = vadd.f32 %v1143, 1.0
        %v1259 = vadd.f32 %v1145, 1.0
        %v1260 = vadd.f32 %v1147, 1.0
        %v1261 = vadd.f32 %v1149, 1.0
        %v1262 = vadd.f32 %v1151, 1.0
        %v1263 = vadd.f32 %v1153, 1.0
        %v1264 = vadd.f32 %v1155, 1.0
        %v1265 = vadd.f32 %v1157, 1.0
        %v1266 = vadd.f32 %v1159, 1.0
        %v1267 = vadd.f32 %v1161, 1.0
        %v1268 = vadd.f32 %v1163, 1.0
        %v1269 = vadd.f32 %v1165, 1.0
        %v1270 = vadd.f32 %v1167, 1.0
        %v1271 = vadd.f32 %v1169, 1.0
        %v1272 = vadd.f32 %v1171, 1.0
        %v1273 = vadd.f32 %v1173, 1.0
        %v1274 = vadd.f32 %v1175, 1.0
        %v1275 = vadd.f32 %v1177, 1.0
        %v1276 = vadd.f32 %v1179, 1.0
        %v1277 = vadd.f32 %v1181, 1.0
        %v1278 = vadd.f32 %v1183, 1.0
        %v1279 = vadd.f32 %v1185, 1.0
        %v1280 = vadd.f32 %v1187, 1.0
        %v1281 = vadd.f32 %v1189, 1.0
        %v1282 = vadd.f32 %v1191, 1.0
        %v1283 = vadd.f32 %v1193, 1.0
        %v1284 = vadd.f32 %v1195, 1.0
        %v1285 = vadd.f32 %v1197, 1.0
        %v1286 = vadd.f32 %v1199, 1.0
        %v1287 = vadd.f32 %v1201, 1.0
        %v1288 = vadd.f32 %v1203, 1.0
        %v1289 = vadd.f32 %v1205, 1.0
        %v1290 = vadd.f32 %v1207, 1.0
        %v1291 = vadd.f32 %v1209, 1.0
        %v1292 = vadd.f32 %v1211, 1.0
        %v1293 = vadd.f32 %v1213, 1.0
        %v1294 = vadd.f32 %v1215, 1.0
        %v1295 = vadd.f32 %v1217, 1.0
        %v1296 = vadd.f32 %v1219, 1.0
        %v1297 = vadd.f32 %v1221, 1.0
        %v1298 = vadd.f32 %v1223, 1.0
        %v1299 = vadd.f32 %v1225, 1.0
        %v1300 = vadd.f32 %v1227, 1.0
        %v1301 = vadd.f32 %v1229, 1.0
        %v1302 = vadd.f32 %v1231, 1.0
        %v1303 = vadd.f32 %v1233, 1.0
        %v1304 = vadd.f32 %v1235, 1.0
        %v1305 = vadd.f32 %v1237, 1.0
        %v1306 = vadd.f32 %v1239, 1.0
        %v1307 = vadd.f32 %v1241, 1.0
        %v1308 = vadd.f32 %v1243, 1.0
        %v1309 = vadd.f32 %v1245, 1.0
        %v1310 = vrcp.pop %v1246
        %v1311 = vmul.f32 1.0, %v1310
        %v1312 = vrcp.pop %v1247
        %v1313 = vmul.f32 1.0, %v1312
        %v1314 = vrcp.pop %v1248
        %v1315 = vmul.f32 1.0, %v1314
        %v1316 = vrcp.pop %v1249
        %v1317 = vmul.f32 1.0, %v1316
        %v1318 = vrcp.pop %v1250
        %v1319 = vmul.f32 1.0, %v1318
        %v1320 = vrcp.pop %v1251
        %v1321 = vmul.f32 1.0, %v1320
        %v1322 = vrcp.pop %v1252
        %v1323 = vmul.f32 1.0, %v1322
        %v1324 = vrcp.pop %v1253
        %v1325 = vmul.f32 1.0, %v1324
        %v1326 = vrcp.pop %v1254
        %v1327 = vmul.f32 1.0, %v1326
        %v1328 = vrcp.pop %v1255
        %v1329 = vmul.f32 1.0, %v1328
        %v1330 = vrcp.pop %v1256
        %v1331 = vmul.f32 1.0, %v1330
        %v1332 = vrcp.pop %v1257
        %v1333 = vmul.f32 1.0, %v1332
        %v1334 = vrcp.pop %v1258
        %v1335 = vmul.f32 1.0, %v1334
        %v1336 = vrcp.pop %v1259
        %v1337 = vmul.f32 1.0, %v1336
        %v1338 = vrcp.pop %v1260
        %v1339 = vmul.f32 1.0, %v1338
        %v1340 = vrcp.pop %v1261
        %v1341 = vmul.f32 1.0, %v1340
        %v1342 = vrcp.pop %v1262
        %v1343 = vmul.f32 1.0, %v1342
        %v1344 = vrcp.pop %v1263
        %v1345 = vmul.f32 1.0, %v1344
        %v1346 = vrcp.pop %v1264
        %v1347 = vmul.f32 1.0, %v1346
        %v1348 = vrcp.pop %v1265
        %v1349 = vmul.f32 1.0, %v1348
        %v1350 = vrcp.pop %v1266
        %v1351 = vmul.f32 1.0, %v1350
        %v1352 = vrcp.pop %v1267
        %v1353 = vmul.f32 1.0, %v1352
        %v1354 = vrcp.pop %v1268
        %v1355 = vmul.f32 1.0, %v1354
        %v1356 = vrcp.pop %v1269
        %v1357 = vmul.f32 1.0, %v1356
        %v1358 = vrcp.pop %v1270
        %v1359 = vmul.f32 1.0, %v1358
        %v1360 = vrcp.pop %v1271
        %v1361 = vmul.f32 1.0, %v1360
        %v1362 = vrcp.pop %v1272
        %v1363 = vmul.f32 1.0, %v1362
        %v1364 = vrcp.pop %v1273
        %v1365 = vmul.f32 1.0, %v1364
        %v1366 = vrcp.pop %v1274
        %v1367 = vmul.f32 1.0, %v1366
        %v1368 = vrcp.pop %v1275
        %v1369 = vmul.f32 1.0, %v1368
        %v1370 = vrcp.pop %v1276
        %v1371 = vmul.f32 1.0, %v1370
        %v1372 = vrcp.pop %v1277
        %v1373 = vmul.f32 1.0, %v1372
        %v1374 = vrcp.pop %v1278
        %v1375 = vmul.f32 1.0, %v1374
        %v1376 = vrcp.pop %v1279
        %v1377 = vmul.f32 1.0, %v1376
        %v1378 = vrcp.pop %v1280
        %v1379 = vmul.f32 1.0, %v1378
        %v1380 = vrcp.pop %v1281
        %v1381 = vmul.f32 1.0, %v1380
        %v1382 = vrcp.pop %v1282
        %v1383 = vmul.f32 1.0, %v1382
        %v1384 = vrcp.pop %v1283
        %v1385 = vmul.f32 1.0, %v1384
        %v1386 = vrcp.pop %v1284
        %v1387 = vmul.f32 1.0, %v1386
        %v1388 = vrcp.pop %v1285
        %v1389 = vmul.f32 1.0, %v1388
        %v1390 = vrcp.pop %v1286
        %v1391 = vmul.f32 1.0, %v1390
        %v1392 = vrcp.pop %v1287
        %v1393 = vmul.f32 1.0, %v1392
        %v1394 = vrcp.pop %v1288
        %v1395 = vmul.f32 1.0, %v1394
        %v1396 = vrcp.pop %v1289
        %v1397 = vmul.f32 1.0, %v1396
        %v1398 = vrcp.pop %v1290
        %v1399 = vmul.f32 1.0, %v1398
        %v1400 = vrcp.pop %v1291
        %v1401 = vmul.f32 1.0, %v1400
        %v1402 = vrcp.pop %v1292
        %v1403 = vmul.f32 1.0, %v1402
        %v1404 = vrcp.pop %v1293
        %v1405 = vmul.f32 1.0, %v1404
        %v1406 = vrcp.pop %v1294
        %v1407 = vmul.f32 1.0, %v1406
        %v1408 = vrcp.pop %v1295
        %v1409 = vmul.f32 1.0, %v1408
        %v1410 = vrcp.pop %v1296
        %v1411 = vmul.f32 1.0, %v1410
        %v1412 = vrcp.pop %v1297
        %v1413 = vmul.f32 1.0, %v1412
        %v1414 = vrcp.pop %v1298
        %v1415 = vmul.f32 1.0, %v1414
        %v1416 = vrcp.pop %v1299
        %v1417 = vmul.f32 1.0, %v1416
        %v1418 = vrcp.pop %v1300
        %v1419 = vmul.f32 1.0, %v1418
        %v1420 = vrcp.pop %v1301
        %v1421 = vmul.f32 1.0, %v1420
        %v1422 = vrcp.pop %v1302
        %v1423 = vmul.f32 1.0, %v1422
        %v1424 = vrcp.pop %v1303
        %v1425 = vmul.f32 1.0, %v1424
        %v1426 = vrcp.pop %v1304
        %v1427 = vmul.f32 1.0, %v1426
        %v1428 = vrcp.pop %v1305
        %v1429 = vmul.f32 1.0, %v1428
        %v1430 = vrcp.pop %v1306
        %v1431 = vmul.f32 1.0, %v1430
        %v1432 = vrcp.pop %v1307
        %v1433 = vmul.f32 1.0, %v1432
        %v1434 = vrcp.pop %v1308
        %v1435 = vmul.f32 1.0, %v1434
        %v1436 = vrcp.pop %v1309
        %v1437 = vmul.f32 1.0, %v1436
        %v1438 = vmul.f32 %v575, %v1311
        %v1439 = vmul.f32 %v577, %v1313
        %v1440 = vmul.f32 %v581, %v1315
        %v1441 = vmul.f32 %v583, %v1317
        %v1442 = vmul.f32 %v587, %v1319
        %v1443 = vmul.f32 %v589, %v1321
        %v1444 = vmul.f32 %v593, %v1323
        %v1445 = vmul.f32 %v595, %v1325
        %v1446 = vmul.f32 %v599, %v1327
        %v1447 = vmul.f32 %v601, %v1329
        %v1448 = vmul.f32 %v605, %v1331
        %v1449 = vmul.f32 %v607, %v1333
        %v1450 = vmul.f32 %v611, %v1335
        %v1451 = vmul.f32 %v613, %v1337
        %v1452 = vmul.f32 %v617, %v1339
        %v1453 = vmul.f32 %v619, %v1341
        %v1454 = vmul.f32 %v623, %v1343
        %v1455 = vmul.f32 %v625, %v1345
        %v1456 = vmul.f32 %v629, %v1347
        %v1457 = vmul.f32 %v631, %v1349
        %v1458 = vmul.f32 %v635, %v1351
        %v1459 = vmul.f32 %v637, %v1353
        %v1460 = vmul.f32 %v641, %v1355
        %v1461 = vmul.f32 %v643, %v1357
        %v1462 = vmul.f32 %v647, %v1359
        %v1463 = vmul.f32 %v649, %v1361
        %v1464 = vmul.f32 %v653, %v1363
        %v1465 = vmul.f32 %v655, %v1365
        %v1466 = vmul.f32 %v659, %v1367
        %v1467 = vmul.f32 %v661, %v1369
        %v1468 = vmul.f32 %v665, %v1371
        %v1469 = vmul.f32 %v667, %v1373
        %v1470 = vmul.f32 %v671, %v1375
        %v1471 = vmul.f32 %v673, %v1377
        %v1472 = vmul.f32 %v677, %v1379
        %v1473 = vmul.f32 %v679, %v1381
        %v1474 = vmul.f32 %v683, %v1383
        %v1475 = vmul.f32 %v685, %v1385
        %v1476 = vmul.f32 %v689, %v1387
        %v1477 = vmul.f32 %v691, %v1389
        %v1478 = vmul.f32 %v695, %v1391
        %v1479 = vmul.f32 %v697, %v1393
        %v1480 = vmul.f32 %v701, %v1395
        %v1481 = vmul.f32 %v703, %v1397
        %v1482 = vmul.f32 %v707, %v1399
        %v1483 = vmul.f32 %v709, %v1401
        %v1484 = vmul.f32 %v713, %v1403
        %v1485 = vmul.f32 %v715, %v1405
        %v1486 = vmul.f32 %v719, %v1407
        %v1487 = vmul.f32 %v721, %v1409
        %v1488 = vmul.f32 %v725, %v1411
        %v1489 = vmul.f32 %v727, %v1413
        %v1490 = vmul.f32 %v731, %v1415
        %v1491 = vmul.f32 %v733, %v1417
        %v1492 = vmul.f32 %v737, %v1419
        %v1493 = vmul.f32 %v739, %v1421
        %v1494 = vmul.f32 %v743, %v1423
        %v1495 = vmul.f32 %v745, %v1425
        %v1496 = vmul.f32 %v749, %v1427
        %v1497 = vmul.f32 %v751, %v1429
        %v1498 = vmul.f32 %v755, %v1431
        %v1499 = vmul.f32 %v757, %v1433
        %v1500 = vmul.f32 %v761, %v1435
        %v1501 = vmul.f32 %v763, %v1437
        %v1502 = vmul.f32 %v1438, %v864
        %v1503 = vmul.f32 %v1439, %v866
        %v1504 = vmul.f32 %v1440, %v870
        %v1505 = vmul.f32 %v1441, %v872
        %v1506 = vmul.f32 %v1442, %v876
        %v1507 = vmul.f32 %v1443, %v878
        %v1508 = vmul.f32 %v1444, %v882
        %v1509 = vmul.f32 %v1445, %v884
        %v1510 = vmul.f32 %v1446, %v888
        %v1511 = vmul.f32 %v1447, %v890
        %v1512 = vmul.f32 %v1448, %v894
        %v1513 = vmul.f32 %v1449, %v896
        %v1514 = vmul.f32 %v1450, %v900
        %v1515 = vmul.f32 %v1451, %v902
        %v1516 = vmul.f32 %v1452, %v906
        %v1517 = vmul.f32 %v1453, %v908
        %v1518 = vmul.f32 %v1454, %v912
        %v1519 = vmul.f32 %v1455, %v914
        %v1520 = vmul.f32 %v1456, %v918
        %v1521 = vmul.f32 %v1457, %v920
        %v1522 = vmul.f32 %v1458, %v924
        %v1523 = vmul.f32 %v1459, %v926
        %v1524 = vmul.f32 %v1460, %v930
        %v1525 = vmul.f32 %v1461, %v932
        %v1526 = vmul.f32 %v1462, %v936
        %v1527 = vmul.f32 %v1463, %v938
        %v1528 = vmul.f32 %v1464, %v942
        %v1529 = vmul.f32 %v1465, %v944
        %v1530 = vmul.f32 %v1466, %v948
        %v1531 = vmul.f32 %v1467, %v950
        %v1532 = vmul.f32 %v1468, %v954
        %v1533 = vmul.f32 %v1469, %v956
        %v1534 = vmul.f32 %v1470, %v960
        %v1535 = vmul.f32 %v1471, %v962
        %v1536 = vmul.f32 %v1472, %v966
        %v1537 = vmul.f32 %v1473, %v968
        %v1538 = vmul.f32 %v1474, %v972
        %v1539 = vmul.f32 %v1475, %v974
        %v1540 = vmul.f32 %v1476, %v978
        %v1541 = vmul.f32 %v1477, %v980
        %v1542 = vmul.f32 %v1478, %v984
        %v1543 = vmul.f32 %v1479, %v986
        %v1544 = vmul.f32 %v1480, %v990
        %v1545 = vmul.f32 %v1481, %v992
        %v1546 = vmul.f32 %v1482, %v996
        %v1547 = vmul.f32 %v1483, %v998
        %v1548 = vmul.f32 %v1484, %v1002
        %v1549 = vmul.f32 %v1485, %v1004
        %v1550 = vmul.f32 %v1486, %v1008
        %v1551 = vmul.f32 %v1487, %v1010
        %v1552 = vmul.f32 %v1488, %v1014
        %v1553 = vmul.f32 %v1489, %v1016
        %v1554 = vmul.f32 %v1490, %v1020
        %v1555 = vmul.f32 %v1491, %v1022
        %v1556 = vmul.f32 %v1492, %v1026
        %v1557 = vmul.f32 %v1493, %v1028
        %v1558 = vmul.f32 %v1494, %v1032
        %v1559 = vmul.f32 %v1495, %v1034
        %v1560 = vmul.f32 %v1496, %v1038
        %v1561 = vmul.f32 %v1497, %v1040
        %v1562 = vmul.f32 %v1498, %v1044
        %v1563 = vmul.f32 %v1499, %v1046
        %v1564 = vmul.f32 %v1500, %v1050
        %v1565 = vmul.f32 %v1501, %v1052
        %v1566 = vld [vmem:[%s401] sm:$0xff]
        %v1567 = vld [vmem:[%s401 + $0x8] sm:$0xff]
        %v1568 = vld [vmem:[%s401 + $0x10] sm:$0xff]
        %v1569 = vld [vmem:[%s401 + $0x18] sm:$0xff]
        %v1570 = vld [vmem:[%s401 + $0x20] sm:$0xff]
        %v1571 = vld [vmem:[%s401 + $0x28] sm:$0xff]
        %v1572 = vld [vmem:[%s401 + $0x30] sm:$0xff]
        %v1573 = vld [vmem:[%s401 + $0x38] sm:$0xff]
        %v1574 = vld [vmem:[%s401 + $0x40] sm:$0xff]
        %v1575 = vld [vmem:[%s401 + $0x48] sm:$0xff]
        %v1576 = vld [vmem:[%s401 + $0x50] sm:$0xff]
        %v1577 = vld [vmem:[%s401 + $0x58] sm:$0xff]
        %v1578 = vld [vmem:[%s401 + $0x60] sm:$0xff]
        %v1579 = vld [vmem:[%s401 + $0x68] sm:$0xff]
        %v1580 = vld [vmem:[%s401 + $0x70] sm:$0xff]
        %v1581 = vld [vmem:[%s401 + $0x78] sm:$0xff]
        %v1582 = vld [vmem:[%s401 + $0x80] sm:$0xff]
        %v1583 = vld [vmem:[%s401 + $0x88] sm:$0xff]
        %v1584 = vld [vmem:[%s401 + $0x90] sm:$0xff]
        %v1585 = vld [vmem:[%s401 + $0x98] sm:$0xff]
        %v1586 = vld [vmem:[%s401 + $0xa0] sm:$0xff]
        %v1587 = vld [vmem:[%s401 + $0xa8] sm:$0xff]
        %v1588 = vld [vmem:[%s401 + $0xb0] sm:$0xff]
        %v1589 = vld [vmem:[%s401 + $0xb8] sm:$0xff]
        %v1590 = vld [vmem:[%s401 + $0xc0] sm:$0xff]
        %v1591 = vld [vmem:[%s401 + $0xc8] sm:$0xff]
        %v1592 = vld [vmem:[%s401 + $0xd0] sm:$0xff]
        %v1593 = vld [vmem:[%s401 + $0xd8] sm:$0xff]
        %v1594 = vld [vmem:[%s401 + $0xe0] sm:$0xff]
        %v1595 = vld [vmem:[%s401 + $0xe8] sm:$0xff]
        %v1596 = vld [vmem:[%s401 + $0xf0] sm:$0xff]
        %v1597 = vld [vmem:[%s401 + $0xf8] sm:$0xff]
        %v1598 = vld [vmem:[%s388] sm:$0xff]
        %v1599 = vld [vmem:[%s388 + $0x8] sm:$0xff]
        %v1600 = vld [vmem:[%s388 + $0x10] sm:$0xff]
        %v1601 = vld [vmem:[%s388 + $0x18] sm:$0xff]
        %v1602 = vld [vmem:[%s388 + $0x20] sm:$0xff]
        %v1603 = vld [vmem:[%s388 + $0x28] sm:$0xff]
        %v1604 = vld [vmem:[%s388 + $0x30] sm:$0xff]
        %v1605 = vld [vmem:[%s388 + $0x38] sm:$0xff]
        %v1606 = vld [vmem:[%s388 + $0x40] sm:$0xff]
        %v1607 = vld [vmem:[%s388 + $0x48] sm:$0xff]
        %v1608 = vld [vmem:[%s388 + $0x50] sm:$0xff]
        %v1609 = vld [vmem:[%s388 + $0x58] sm:$0xff]
        %v1610 = vld [vmem:[%s388 + $0x60] sm:$0xff]
        %v1611 = vld [vmem:[%s388 + $0x68] sm:$0xff]
        %v1612 = vld [vmem:[%s388 + $0x70] sm:$0xff]
        %v1613 = vld [vmem:[%s388 + $0x78] sm:$0xff]
        %v1614 = vld [vmem:[%s388 + $0x80] sm:$0xff]
        %v1615 = vld [vmem:[%s388 + $0x88] sm:$0xff]
        %v1616 = vld [vmem:[%s388 + $0x90] sm:$0xff]
        %v1617 = vld [vmem:[%s388 + $0x98] sm:$0xff]
        %v1618 = vld [vmem:[%s388 + $0xa0] sm:$0xff]
        %v1619 = vld [vmem:[%s388 + $0xa8] sm:$0xff]
        %v1620 = vld [vmem:[%s388 + $0xb0] sm:$0xff]
        %v1621 = vld [vmem:[%s388 + $0xb8] sm:$0xff]
        %v1622 = vld [vmem:[%s388 + $0xc0] sm:$0xff]
        %v1623 = vld [vmem:[%s388 + $0xc8] sm:$0xff]
        %v1624 = vld [vmem:[%s388 + $0xd0] sm:$0xff]
        %v1625 = vld [vmem:[%s388 + $0xd8] sm:$0xff]
        %v1626 = vld [vmem:[%s388 + $0xe0] sm:$0xff]
        %v1627 = vld [vmem:[%s388 + $0xe8] sm:$0xff]
        %v1628 = vld [vmem:[%s388 + $0xf0] sm:$0xff]
        %v1629 = vld [vmem:[%s388 + $0xf8] sm:$0xff]
        %1630 = vmatprep.subr.mxu0 0.0
        %1631 = vmatpush1.msra.mxu0 %v1598
        %1632 = vmatprep.subr.mxu0 0.0
        %1633 = vmatpush1.msra.mxu0 %v1599
        %1634 = vmatprep.subr.mxu0 0.0
        %1635 = vmatpush1.msra.mxu0 %v1600
        %1636 = vmatprep.subr.mxu0 0.0
        %1637 = vmatpush1.msra.mxu0 %v1601
        %1638 = vmatprep.subr.mxu0 0.0
        %1639 = vmatpush1.msra.mxu0 %v1602
        %1640 = vmatprep.subr.mxu0 0.0
        %1641 = vmatpush1.msra.mxu0 %v1603
        %1642 = vmatprep.subr.mxu0 0.0
        %1643 = vmatpush1.msra.mxu0 %v1604
        %1644 = vmatprep.subr.mxu0 0.0
        %1645 = vmatpush1.msra.mxu0 %v1605
        %1646 = vmatprep.subr.mxu0 0.0
        %1647 = vmatpush1.msra.mxu0 %v1606
        %1648 = vmatprep.subr.mxu0 0.0
        %1649 = vmatpush1.msra.mxu0 %v1607
        %1650 = vmatprep.subr.mxu0 0.0
        %1651 = vmatpush1.msra.mxu0 %v1608
        %1652 = vmatprep.subr.mxu0 0.0
        %1653 = vmatpush1.msra.mxu0 %v1609
        %1654 = vmatprep.subr.mxu0 0.0
        %1655 = vmatpush1.msra.mxu0 %v1610
        %1656 = vmatprep.subr.mxu0 0.0
        %1657 = vmatpush1.msra.mxu0 %v1611
        %1658 = vmatprep.subr.mxu0 0.0
        %1659 = vmatpush1.msra.mxu0 %v1612
        %1660 = vmatprep.subr.mxu0 0.0
        %1661 = vmatpush1.msra.mxu0 %v1613
        %1662 = vmatprep.subr.mxu0 0.0
        %1663 = vmatpush1.msra.mxu0 %v1614
        %1664 = vmatprep.subr.mxu0 0.0
        %1665 = vmatpush1.msra.mxu0 %v1615
        %1666 = vmatprep.subr.mxu0 0.0
        %1667 = vmatpush1.msra.mxu0 %v1616
        %1668 = vmatprep.subr.mxu0 0.0
        %1669 = vmatpush1.msra.mxu0 %v1617
        %1670 = vmatprep.subr.mxu0 0.0
        %1671 = vmatpush1.msra.mxu0 %v1618
        %1672 = vmatprep.subr.mxu0 0.0
        %1673 = vmatpush1.msra.mxu0 %v1619
        %1674 = vmatprep.subr.mxu0 0.0
        %1675 = vmatpush1.msra.mxu0 %v1620
        %1676 = vmatprep.subr.mxu0 0.0
        %1677 = vmatpush1.msra.mxu0 %v1621
        %1678 = vmatprep.subr.mxu0 0.0
        %1679 = vmatpush1.msra.mxu0 %v1622
        %1680 = vmatprep.subr.mxu0 0.0
        %1681 = vmatpush1.msra.mxu0 %v1623
        %1682 = vmatprep.subr.mxu0 0.0
        %1683 = vmatpush1.msra.mxu0 %v1624
        %1684 = vmatprep.subr.mxu0 0.0
        %1685 = vmatpush1.msra.mxu0 %v1625
        %1686 = vmatprep.subr.mxu0 0.0
        %1687 = vmatpush1.msra.mxu0 %v1626
        %1688 = vmatprep.subr.mxu0 0.0
        %1689 = vmatpush1.msra.mxu0 %v1627
        %1690 = vmatprep.subr.mxu0 0.0
        %1691 = vmatpush1.msra.mxu0 %v1628
        %1692 = vmatprep.subr.mxu0 0.0
        %1693 = vmatpush1.msra.mxu0 %v1629
        %1694 = vmatprep.mubr.f32.mxu0 %v1503
        %1695 = vmatmul.mubr.f32.gmra.mrb[0].mxu0 %v1502
        %v1696 = vpop.f32.mrb[0].mxu0
        %v1697 = vadd.f32 0.0, %v1696
        %v1698 = vpop.f32.mrb[0].mxu0
        %1699 = vmatprep.mubr.f32.mxu0 %v1505
        %1700 = vmatmul.mubr.f32.gmra.mrb[0].mxu0 %v1504
        %v1701 = vpop.f32.mrb[0].mxu0
        %v1702 = vadd.f32 0.0, %v1701
        %v1703 = vpop.f32.mrb[0].mxu0
        %1704 = vmatprep.mubr.f32.mxu0 %v1507
        %1705 = vmatmul.mubr.f32.gmra.mrb[0].mxu0 %v1506
        %v1706 = vpop.f32.mrb[0].mxu0
        %v1707 = vadd.f32 0.0, %v1706
        %v1708 = vpop.f32.mrb[0].mxu0
        %1709 = vmatprep.mubr.f32.mxu0 %v1509
        %1710 = vmatmul.mubr.f32.gmra.mrb[0].mxu0 %v1508
        %v1711 = vpop.f32.mrb[0].mxu0
        %v1712 = vadd.f32 0.0, %v1711
        %v1713 = vpop.f32.mrb[0].mxu0
        %1714 = vmatprep.mubr.f32.mxu0 %v1511
        %1715 = vmatmul.mubr.f32.gmra.mrb[0].mxu0 %v1510
        %v1716 = vpop.f32.mrb[0].mxu0
        %v1717 = vadd.f32 0.0, %v1716
        %v1718 = vpop.f32.mrb[0].mxu0
        %1719 = vmatprep.mubr.f32.mxu0 %v1513
        %1720 = vmatmul.mubr.f32.gmra.mrb[0].mxu0 %v1512
        %v1721 = vpop.f32.mrb[0].mxu0
        %v1722 = vadd.f32 0.0, %v1721
        %v1723 = vpop.f32.mrb[0].mxu0
        %1724 = vmatprep.mubr.f32.mxu0 %v1515
        %1725 = vmatmul.mubr.f32.gmra.mrb[0].mxu0 %v1514
        %v1726 = vpop.f32.mrb[0].mxu0
        %v1727 = vadd.f32 0.0, %v1726
        %v1728 = vpop.f32.mrb[0].mxu0
        %1729 = vmatprep.mubr.f32.mxu0 %v1517
        %1730 = vmatmul.mubr.f32.gmra.mrb[0].mxu0 %v1516
        %v1731 = vpop.f32.mrb[0].mxu0
        %v1732 = vadd.f32 0.0, %v1731
        %v1733 = vpop.f32.mrb[0].mxu0
        %1734 = vmatprep.mubr.f32.mxu0 %v1519
        %1735 = vmatmul.mubr.f32.gmra.mrb[0].mxu0 %v1518
        %v1736 = vpop.f32.mrb[0].mxu0
        %v1737 = vadd.f32 0.0, %v1736
        %v1738 = vpop.f32.mrb[0].mxu0
        %1739 = vmatprep.mubr.f32.mxu0 %v1521
        %1740 = vmatmul.mubr.f32.gmra.mrb[0].mxu0 %v1520
        %v1741 = vpop.f32.mrb[0].mxu0
        %v1742 = vadd.f32 0.0, %v1741
        %v1743 = vpop.f32.mrb[0].mxu0
        %1744 = vmatprep.mubr.f32.mxu0 %v1523
        %1745 = vmatmul.mubr.f32.gmra.mrb[0].mxu0 %v1522
        %v1746 = vpop.f32.mrb[0].mxu0
        %v1747 = vadd.f32 0.0, %v1746
        %v1748 = vpop.f32.mrb[0].mxu0
        %1749 = vmatprep.mubr.f32.mxu0 %v1525
        %1750 = vmatmul.mubr.f32.gmra.mrb[0].mxu0 %v1524
        %v1751 = vpop.f32.mrb[0].mxu0
        %v1752 = vadd.f32 0.0, %v1751
        %v1753 = vpop.f32.mrb[0].mxu0
        %1754 = vmatprep.mubr.f32.mxu0 %v1527
        %1755 = vmatmul.mubr.f32.gmra.mrb[0].mxu0 %v1526
        %v1756 = vpop.f32.mrb[0].mxu0
        %v1757 = vadd.f32 0.0, %v1756
        %v1758 = vpop.f32.mrb[0].mxu0
        %1759 = vmatprep.mubr.f32.mxu0 %v1529
        %1760 = vmatmul.mubr.f32.gmra.mrb[0].mxu0 %v1528
        %v1761 = vpop.f32.mrb[0].mxu0
        %v1762 = vadd.f32 0.0, %v1761
        %v1763 = vpop.f32.mrb[0].mxu0
        %1764 = vmatprep.mubr.f32.mxu0 %v1531
        %1765 = vmatmul.mubr.f32.gmra.mrb[0].mxu0 %v1530
        %v1766 = vpop.f32.mrb[0].mxu0
        %v1767 = vadd.f32 0.0, %v1766
        %v1768 = vpop.f32.mrb[0].mxu0
        %1769 = vmatprep.mubr.f32.mxu0 %v1533
        %1770 = vmatmul.mubr.f32.gmra.mrb[0].mxu0 %v1532
        %v1771 = vpop.f32.mrb[0].mxu0
        %v1772 = vadd.f32 0.0, %v1771
        %v1773 = vpop.f32.mrb[0].mxu0
        %1774 = vmatprep.mubr.f32.mxu0 %v1535
        %1775 = vmatmul.mubr.f32.gmra.mrb[0].mxu0 %v1534
        %v1776 = vpop.f32.mrb[0].mxu0
        %v1777 = vadd.f32 0.0, %v1776
        %v1778 = vpop.f32.mrb[0].mxu0
        %1779 = vmatprep.mubr.f32.mxu0 %v1537
        %1780 = vmatmul.mubr.f32.gmra.mrb[0].mxu0 %v1536
        %v1781 = vpop.f32.mrb[0].mxu0
        %v1782 = vadd.f32 0.0, %v1781
        %v1783 = vpop.f32.mrb[0].mxu0
        %1784 = vmatprep.mubr.f32.mxu0 %v1539
        %1785 = vmatmul.mubr.f32.gmra.mrb[0].mxu0 %v1538
        %v1786 = vpop.f32.mrb[0].mxu0
        %v1787 = vadd.f32 0.0, %v1786
        %v1788 = vpop.f32.mrb[0].mxu0
        %1789 = vmatprep.mubr.f32.mxu0 %v1541
        %1790 = vmatmul.mubr.f32.gmra.mrb[0].mxu0 %v1540
        %v1791 = vpop.f32.mrb[0].mxu0
        %v1792 = vadd.f32 0.0, %v1791
        %v1793 = vpop.f32.mrb[0].mxu0
        %1794 = vmatprep.mubr.f32.mxu0 %v1543
        %1795 = vmatmul.mubr.f32.gmra.mrb[0].mxu0 %v1542
        %v1796 = vpop.f32.mrb[0].mxu0
        %v1797 = vadd.f32 0.0, %v1796
        %v1798 = vpop.f32.mrb[0].mxu0
        %1799 = vmatprep.mubr.f32.mxu0 %v1545
        %1800 = vmatmul.mubr.f32.gmra.mrb[0].mxu0 %v1544
        %v1801 = vpop.f32.mrb[0].mxu0
        %v1802 = vadd.f32 0.0, %v1801
        %v1803 = vpop.f32.mrb[0].mxu0
        %1804 = vmatprep.mubr.f32.mxu0 %v1547
        %1805 = vmatmul.mubr.f32.gmra.mrb[0].mxu0 %v1546
        %v1806 = vpop.f32.mrb[0].mxu0
        %v1807 = vadd.f32 0.0, %v1806
        %v1808 = vpop.f32.mrb[0].mxu0
        %1809 = vmatprep.mubr.f32.mxu0 %v1549
        %1810 = vmatmul.mubr.f32.gmra.mrb[0].mxu0 %v1548
        %v1811 = vpop.f32.mrb[0].mxu0
        %v1812 = vadd.f32 0.0, %v1811
        %v1813 = vpop.f32.mrb[0].mxu0
        %1814 = vmatprep.mubr.f32.mxu0 %v1551
        %1815 = vmatmul.mubr.f32.gmra.mrb[0].mxu0 %v1550
        %v1816 = vpop.f32.mrb[0].mxu0
        %v1817 = vadd.f32 0.0, %v1816
        %v1818 = vpop.f32.mrb[0].mxu0
        %1819 = vmatprep.mubr.f32.mxu0 %v1553
        %1820 = vmatmul.mubr.f32.gmra.mrb[0].mxu0 %v1552
        %v1821 = vpop.f32.mrb[0].mxu0
        %v1822 = vadd.f32 0.0, %v1821
        %v1823 = vpop.f32.mrb[0].mxu0
        %1824 = vmatprep.mubr.f32.mxu0 %v1555
        %1825 = vmatmul.mubr.f32.gmra.mrb[0].mxu0 %v1554
        %v1826 = vpop.f32.mrb[0].mxu0
        %v1827 = vadd.f32 0.0, %v1826
        %v1828 = vpop.f32.mrb[0].mxu0
        %1829 = vmatprep.mubr.f32.mxu0 %v1557
        %1830 = vmatmul.mubr.f32.gmra.mrb[0].mxu0 %v1556
        %v1831 = vpop.f32.mrb[0].mxu0
        %v1832 = vadd.f32 0.0, %v1831
        %v1833 = vpop.f32.mrb[0].mxu0
        %1834 = vmatprep.mubr.f32.mxu0 %v1559
        %1835 = vmatmul.mubr.f32.gmra.mrb[0].mxu0 %v1558
        %v1836 = vpop.f32.mrb[0].mxu0
        %v1837 = vadd.f32 0.0, %v1836
        %v1838 = vpop.f32.mrb[0].mxu0
        %1839 = vmatprep.mubr.f32.mxu0 %v1561
        %1840 = vmatmul.mubr.f32.gmra.mrb[0].mxu0 %v1560
        %v1841 = vpop.f32.mrb[0].mxu0
        %v1842 = vadd.f32 0.0, %v1841
        %v1843 = vpop.f32.mrb[0].mxu0
        %1844 = vmatprep.mubr.f32.mxu0 %v1563
        %1845 = vmatmul.mubr.f32.gmra.mrb[0].mxu0 %v1562
        %v1846 = vpop.f32.mrb[0].mxu0
        %v1847 = vadd.f32 0.0, %v1846
        %v1848 = vpop.f32.mrb[0].mxu0
        %1849 = vmatprep.mubr.f32.mxu0 %v1565
        %1850 = vmatmul.mubr.f32.gmra.mrb[0].mxu0 %v1564
        %v1851 = vpop.f32.mrb[0].mxu0
        %v1852 = vadd.f32 0.0, %v1851
        %v1853 = vpop.f32.mrb[0].mxu0
        %1854 = vdwg.mxu0
        %v1855 = vadd.f32 %v1566, %v1697
        %v1856 = vadd.f32 %v1567, %v1702
        %v1857 = vadd.f32 %v1568, %v1707
        %v1858 = vadd.f32 %v1569, %v1712
        %v1859 = vadd.f32 %v1570, %v1717
        %v1860 = vadd.f32 %v1571, %v1722
        %v1861 = vadd.f32 %v1572, %v1727
        %v1862 = vadd.f32 %v1573, %v1732
        %v1863 = vadd.f32 %v1574, %v1737
        %v1864 = vadd.f32 %v1575, %v1742
        %v1865 = vadd.f32 %v1576, %v1747
        %v1866 = vadd.f32 %v1577, %v1752
        %v1867 = vadd.f32 %v1578, %v1757
        %v1868 = vadd.f32 %v1579, %v1762
        %v1869 = vadd.f32 %v1580, %v1767
        %v1870 = vadd.f32 %v1581, %v1772
        %v1871 = vadd.f32 %v1582, %v1777
        %v1872 = vadd.f32 %v1583, %v1782
        %v1873 = vadd.f32 %v1584, %v1787
        %v1874 = vadd.f32 %v1585, %v1792
        %v1875 = vadd.f32 %v1586, %v1797
        %v1876 = vadd.f32 %v1587, %v1802
        %v1877 = vadd.f32 %v1588, %v1807
        %v1878 = vadd.f32 %v1589, %v1812
        %v1879 = vadd.f32 %v1590, %v1817
        %v1880 = vadd.f32 %v1591, %v1822
        %v1881 = vadd.f32 %v1592, %v1827
        %v1882 = vadd.f32 %v1593, %v1832
        %v1883 = vadd.f32 %v1594, %v1837
        %v1884 = vadd.f32 %v1595, %v1842
        %v1885 = vadd.f32 %v1596, %v1847
        %v1886 = vadd.f32 %v1597, %v1852
        %1887 = vst [vmem:[%s401] sm:$0xff] %v1855
        %1888 = vst [vmem:[%s401 + $0x8] sm:$0xff] %v1856
        %1889 = vst [vmem:[%s401 + $0x10] sm:$0xff] %v1857
        %1890 = vst [vmem:[%s401 + $0x18] sm:$0xff] %v1858
        %1891 = vst [vmem:[%s401 + $0x20] sm:$0xff] %v1859
        %1892 = vst [vmem:[%s401 + $0x28] sm:$0xff] %v1860
        %1893 = vst [vmem:[%s401 + $0x30] sm:$0xff] %v1861
        %1894 = vst [vmem:[%s401 + $0x38] sm:$0xff] %v1862
        %1895 = vst [vmem:[%s401 + $0x40] sm:$0xff] %v1863
        %1896 = vst [vmem:[%s401 + $0x48] sm:$0xff] %v1864
        %1897 = vst [vmem:[%s401 + $0x50] sm:$0xff] %v1865
        %1898 = vst [vmem:[%s401 + $0x58] sm:$0xff] %v1866
        %1899 = vst [vmem:[%s401 + $0x60] sm:$0xff] %v1867
        %1900 = vst [vmem:[%s401 + $0x68] sm:$0xff] %v1868
        %1901 = vst [vmem:[%s401 + $0x70] sm:$0xff] %v1869
        %1902 = vst [vmem:[%s401 + $0x78] sm:$0xff] %v1870
        %1903 = vst [vmem:[%s401 + $0x80] sm:$0xff] %v1871
        %1904 = vst [vmem:[%s401 + $0x88] sm:$0xff] %v1872
        %1905 = vst [vmem:[%s401 + $0x90] sm:$0xff] %v1873
        %1906 = vst [vmem:[%s401 + $0x98] sm:$0xff] %v1874
        %1907 = vst [vmem:[%s401 + $0xa0] sm:$0xff] %v1875
        %1908 = vst [vmem:[%s401 + $0xa8] sm:$0xff] %v1876
        %1909 = vst [vmem:[%s401 + $0xb0] sm:$0xff] %v1877
        %1910 = vst [vmem:[%s401 + $0xb8] sm:$0xff] %v1878
        %1911 = vst [vmem:[%s401 + $0xc0] sm:$0xff] %v1879
        %1912 = vst [vmem:[%s401 + $0xc8] sm:$0xff] %v1880
        %1913 = vst [vmem:[%s401 + $0xd0] sm:$0xff] %v1881
        %1914 = vst [vmem:[%s401 + $0xd8] sm:$0xff] %v1882
        %1915 = vst [vmem:[%s401 + $0xe0] sm:$0xff] %v1883
        %1916 = vst [vmem:[%s401 + $0xe8] sm:$0xff] %v1884
        %1917 = vst [vmem:[%s401 + $0xf0] sm:$0xff] %v1885
        %1918 = vst [vmem:[%s401 + $0xf8] sm:$0xff] %v1886
      $region48: #{moe_layer_forward.1} parent=39 // pred_fallthru
        _
      // Predicated region
      $region49: #{moe_layer_forward.1} parent=39 // pred_check
        %p1919 = pneg %p403
      $region50: #{moe_layer_forward.1} parent=39 // pred_check_branch
        %1921 = sbr.rel (%p1919) target = $region52
      $region51: #{moe_layer_forward.1} parent=39 // pred_region
        %v1922 = vld [vmem:[%s395] sm:$0xff]
        %v1923 = vld [vmem:[%s395 + $0x8] sm:$0xff]
        %v1924 = vld [vmem:[%s395 + $0x10] sm:$0xff]
        %v1925 = vld [vmem:[%s395 + $0x18] sm:$0xff]
        %v1926 = vld [vmem:[%s395 + $0x20] sm:$0xff]
        %v1927 = vld [vmem:[%s395 + $0x28] sm:$0xff]
        %v1928 = vld [vmem:[%s395 + $0x30] sm:$0xff]
        %v1929 = vld [vmem:[%s395 + $0x38] sm:$0xff]
        %v1930 = vld [vmem:[%s395 + $0x40] sm:$0xff]
        %v1931 = vld [vmem:[%s395 + $0x48] sm:$0xff]
        %v1932 = vld [vmem:[%s395 + $0x50] sm:$0xff]
        %v1933 = vld [vmem:[%s395 + $0x58] sm:$0xff]
        %v1934 = vld [vmem:[%s395 + $0x60] sm:$0xff]
        %v1935 = vld [vmem:[%s395 + $0x68] sm:$0xff]
        %v1936 = vld [vmem:[%s395 + $0x70] sm:$0xff]
        %v1937 = vld [vmem:[%s395 + $0x78] sm:$0xff]
        %v1938 = vld [vmem:[%s395 + $0x80] sm:$0xff]
        %v1939 = vld [vmem:[%s395 + $0x88] sm:$0xff]
        %v1940 = vld [vmem:[%s395 + $0x90] sm:$0xff]
        %v1941 = vld [vmem:[%s395 + $0x98] sm:$0xff]
        %v1942 = vld [vmem:[%s395 + $0xa0] sm:$0xff]
        %v1943 = vld [vmem:[%s395 + $0xa8] sm:$0xff]
        %v1944 = vld [vmem:[%s395 + $0xb0] sm:$0xff]
        %v1945 = vld [vmem:[%s395 + $0xb8] sm:$0xff]
        %v1946 = vld [vmem:[%s395 + $0xc0] sm:$0xff]
        %v1947 = vld [vmem:[%s395 + $0xc8] sm:$0xff]
        %v1948 = vld [vmem:[%s395 + $0xd0] sm:$0xff]
        %v1949 = vld [vmem:[%s395 + $0xd8] sm:$0xff]
        %v1950 = vld [vmem:[%s395 + $0xe0] sm:$0xff]
        %v1951 = vld [vmem:[%s395 + $0xe8] sm:$0xff]
        %v1952 = vld [vmem:[%s395 + $0xf0] sm:$0xff]
        %v1953 = vld [vmem:[%s395 + $0xf8] sm:$0xff]
        %v1954 = vld [vmem:[%s401] sm:$0xff]
        %v1955 = vld [vmem:[%s401 + $0x8] sm:$0xff]
        %v1956 = vld [vmem:[%s401 + $0x10] sm:$0xff]
        %v1957 = vld [vmem:[%s401 + $0x18] sm:$0xff]
        %v1958 = vld [vmem:[%s401 + $0x20] sm:$0xff]
        %v1959 = vld [vmem:[%s401 + $0x28] sm:$0xff]
        %v1960 = vld [vmem:[%s401 + $0x30] sm:$0xff]
        %v1961 = vld [vmem:[%s401 + $0x38] sm:$0xff]
        %v1962 = vld [vmem:[%s401 + $0x40] sm:$0xff]
        %v1963 = vld [vmem:[%s401 + $0x48] sm:$0xff]
        %v1964 = vld [vmem:[%s401 + $0x50] sm:$0xff]
        %v1965 = vld [vmem:[%s401 + $0x58] sm:$0xff]
        %v1966 = vld [vmem:[%s401 + $0x60] sm:$0xff]
        %v1967 = vld [vmem:[%s401 + $0x68] sm:$0xff]
        %v1968 = vld [vmem:[%s401 + $0x70] sm:$0xff]
        %v1969 = vld [vmem:[%s401 + $0x78] sm:$0xff]
        %v1970 = vld [vmem:[%s401 + $0x80] sm:$0xff]
        %v1971 = vld [vmem:[%s401 + $0x88] sm:$0xff]
        %v1972 = vld [vmem:[%s401 + $0x90] sm:$0xff]
        %v1973 = vld [vmem:[%s401 + $0x98] sm:$0xff]
        %v1974 = vld [vmem:[%s401 + $0xa0] sm:$0xff]
        %v1975 = vld [vmem:[%s401 + $0xa8] sm:$0xff]
        %v1976 = vld [vmem:[%s401 + $0xb0] sm:$0xff]
        %v1977 = vld [vmem:[%s401 + $0xb8] sm:$0xff]
        %v1978 = vld [vmem:[%s401 + $0xc0] sm:$0xff]
        %v1979 = vld [vmem:[%s401 + $0xc8] sm:$0xff]
        %v1980 = vld [vmem:[%s401 + $0xd0] sm:$0xff]
        %v1981 = vld [vmem:[%s401 + $0xd8] sm:$0xff]
        %v1982 = vld [vmem:[%s401 + $0xe0] sm:$0xff]
        %v1983 = vld [vmem:[%s401 + $0xe8] sm:$0xff]
        %v1984 = vld [vmem:[%s401 + $0xf0] sm:$0xff]
        %v1985 = vld [vmem:[%s401 + $0xf8] sm:$0xff]
        %1987 = vset.pattern.permute.xlu0 0
        %1988 = vperm.xlu0 %1987, %v1922
        %v1989 = vpop.permute.xlu0 %1988
        %1992 = vset.pattern.permute.xlu0 0
        %1993 = vperm.xlu0 %1992, %v1923
        %v1994 = vpop.permute.xlu0 %1993
        %1997 = vset.pattern.permute.xlu0 0
        %1998 = vperm.xlu0 %1997, %v1924
        %v1999 = vpop.permute.xlu0 %1998
        %2002 = vset.pattern.permute.xlu0 0
        %2003 = vperm.xlu0 %2002, %v1925
        %v2004 = vpop.permute.xlu0 %2003
        %2007 = vset.pattern.permute.xlu0 0
        %2008 = vperm.xlu0 %2007, %v1926
        %v2009 = vpop.permute.xlu0 %2008
        %2012 = vset.pattern.permute.xlu0 0
        %2013 = vperm.xlu0 %2012, %v1927
        %v2014 = vpop.permute.xlu0 %2013
        %2017 = vset.pattern.permute.xlu0 0
        %2018 = vperm.xlu0 %2017, %v1928
        %v2019 = vpop.permute.xlu0 %2018
        %2022 = vset.pattern.permute.xlu0 0
        %2023 = vperm.xlu0 %2022, %v1929
        %v2024 = vpop.permute.xlu0 %2023
        %2027 = vset.pattern.permute.xlu0 0
        %2028 = vperm.xlu0 %2027, %v1930
        %v2029 = vpop.permute.xlu0 %2028
        %2032 = vset.pattern.permute.xlu0 0
        %2033 = vperm.xlu0 %2032, %v1931
        %v2034 = vpop.permute.xlu0 %2033
        %2037 = vset.pattern.permute.xlu0 0
        %2038 = vperm.xlu0 %2037, %v1932
        %v2039 = vpop.permute.xlu0 %2038
        %2042 = vset.pattern.permute.xlu0 0
        %2043 = vperm.xlu0 %2042, %v1933
        %v2044 = vpop.permute.xlu0 %2043
        %2047 = vset.pattern.permute.xlu0 0
        %2048 = vperm.xlu0 %2047, %v1934
        %v2049 = vpop.permute.xlu0 %2048
        %2052 = vset.pattern.permute.xlu0 0
        %2053 = vperm.xlu0 %2052, %v1935
        %v2054 = vpop.permute.xlu0 %2053
        %2057 = vset.pattern.permute.xlu0 0
        %2058 = vperm.xlu0 %2057, %v1936
        %v2059 = vpop.permute.xlu0 %2058
        %2062 = vset.pattern.permute.xlu0 0
        %2063 = vperm.xlu0 %2062, %v1937
        %v2064 = vpop.permute.xlu0 %2063
        %2067 = vset.pattern.permute.xlu0 0
        %2068 = vperm.xlu0 %2067, %v1938
        %v2069 = vpop.permute.xlu0 %2068
        %2072 = vset.pattern.permute.xlu0 0
        %2073 = vperm.xlu0 %2072, %v1939
        %v2074 = vpop.permute.xlu0 %2073
        %2077 = vset.pattern.permute.xlu0 0
        %2078 = vperm.xlu0 %2077, %v1940
        %v2079 = vpop.permute.xlu0 %2078
        %2082 = vset.pattern.permute.xlu0 0
        %2083 = vperm.xlu0 %2082, %v1941
        %v2084 = vpop.permute.xlu0 %2083
        %2087 = vset.pattern.permute.xlu0 0
        %2088 = vperm.xlu0 %2087, %v1942
        %v2089 = vpop.permute.xlu0 %2088
        %2092 = vset.pattern.permute.xlu0 0
        %2093 = vperm.xlu0 %2092, %v1943
        %v2094 = vpop.permute.xlu0 %2093
        %2097 = vset.pattern.permute.xlu0 0
        %2098 = vperm.xlu0 %2097, %v1944
        %v2099 = vpop.permute.xlu0 %2098
        %2102 = vset.pattern.permute.xlu0 0
        %2103 = vperm.xlu0 %2102, %v1945
        %v2104 = vpop.permute.xlu0 %2103
        %2107 = vset.pattern.permute.xlu0 0
        %2108 = vperm.xlu0 %2107, %v1946
        %v2109 = vpop.permute.xlu0 %2108
        %2112 = vset.pattern.permute.xlu0 0
        %2113 = vperm.xlu0 %2112, %v1947
        %v2114 = vpop.permute.xlu0 %2113
        %2117 = vset.pattern.permute.xlu0 0
        %2118 = vperm.xlu0 %2117, %v1948
        %v2119 = vpop.permute.xlu0 %2118
        %2122 = vset.pattern.permute.xlu0 0
        %2123 = vperm.xlu0 %2122, %v1949
        %v2124 = vpop.permute.xlu0 %2123
        %2127 = vset.pattern.permute.xlu0 0
        %2128 = vperm.xlu0 %2127, %v1950
        %v2129 = vpop.permute.xlu0 %2128
        %2132 = vset.pattern.permute.xlu0 0
        %2133 = vperm.xlu0 %2132, %v1951
        %v2134 = vpop.permute.xlu0 %2133
        %2137 = vset.pattern.permute.xlu0 0
        %2138 = vperm.xlu0 %2137, %v1952
        %v2139 = vpop.permute.xlu0 %2138
        %2142 = vset.pattern.permute.xlu0 0
        %2143 = vperm.xlu0 %2142, %v1953
        %v2144 = vpop.permute.xlu0 %2143
        %v2146 = vmul.f32 %v1989, %v1954
        %v2147 = vmul.f32 %v1994, %v1955
        %v2148 = vmul.f32 %v1999, %v1956
        %v2149 = vmul.f32 %v2004, %v1957
        %v2150 = vmul.f32 %v2009, %v1958
        %v2151 = vmul.f32 %v2014, %v1959
        %v2152 = vmul.f32 %v2019, %v1960
        %v2153 = vmul.f32 %v2024, %v1961
        %v2154 = vmul.f32 %v2029, %v1962
        %v2155 = vmul.f32 %v2034, %v1963
        %v2156 = vmul.f32 %v2039, %v1964
        %v2157 = vmul.f32 %v2044, %v1965
        %v2158 = vmul.f32 %v2049, %v1966
        %v2159 = vmul.f32 %v2054, %v1967
        %v2160 = vmul.f32 %v2059, %v1968
        %v2161 = vmul.f32 %v2064, %v1969
        %v2162 = vmul.f32 %v2069, %v1970
        %v2163 = vmul.f32 %v2074, %v1971
        %v2164 = vmul.f32 %v2079, %v1972
        %v2165 = vmul.f32 %v2084, %v1973
        %v2166 = vmul.f32 %v2089, %v1974
        %v2167 = vmul.f32 %v2094, %v1975
        %v2168 = vmul.f32 %v2099, %v1976
        %v2169 = vmul.f32 %v2104, %v1977
        %v2170 = vmul.f32 %v2109, %v1978
        %v2171 = vmul.f32 %v2114, %v1979
        %v2172 = vmul.f32 %v2119, %v1980
        %v2173 = vmul.f32 %v2124, %v1981
        %v2174 = vmul.f32 %v2129, %v1982
        %v2175 = vmul.f32 %v2134, %v1983
        %v2176 = vmul.f32 %v2139, %v1984
        %v2177 = vmul.f32 %v2144, %v1985
        %2178 = vst [vmem:[%s401] sm:$0xff] %v2146
        %2179 = vst [vmem:[%s401 + $0x8] sm:$0xff] %v2147
        %2180 = vst [vmem:[%s401 + $0x10] sm:$0xff] %v2148
        %2181 = vst [vmem:[%s401 + $0x18] sm:$0xff] %v2149
        %2182 = vst [vmem:[%s401 + $0x20] sm:$0xff] %v2150
        %2183 = vst [vmem:[%s401 + $0x28] sm:$0xff] %v2151
        %2184 = vst [vmem:[%s401 + $0x30] sm:$0xff] %v2152
        %2185 = vst [vmem:[%s401 + $0x38] sm:$0xff] %v2153
        %2186 = vst [vmem:[%s401 + $0x40] sm:$0xff] %v2154
        %2187 = vst [vmem:[%s401 + $0x48] sm:$0xff] %v2155
        %2188 = vst [vmem:[%s401 + $0x50] sm:$0xff] %v2156
        %2189 = vst [vmem:[%s401 + $0x58] sm:$0xff] %v2157
        %2190 = vst [vmem:[%s401 + $0x60] sm:$0xff] %v2158
        %2191 = vst [vmem:[%s401 + $0x68] sm:$0xff] %v2159
        %2192 = vst [vmem:[%s401 + $0x70] sm:$0xff] %v2160
        %2193 = vst [vmem:[%s401 + $0x78] sm:$0xff] %v2161
        %2194 = vst [vmem:[%s401 + $0x80] sm:$0xff] %v2162
        %2195 = vst [vmem:[%s401 + $0x88] sm:$0xff] %v2163
        %2196 = vst [vmem:[%s401 + $0x90] sm:$0xff] %v2164
        %2197 = vst [vmem:[%s401 + $0x98] sm:$0xff] %v2165
        %2198 = vst [vmem:[%s401 + $0xa0] sm:$0xff] %v2166
        %2199 = vst [vmem:[%s401 + $0xa8] sm:$0xff] %v2167
        %2200 = vst [vmem:[%s401 + $0xb0] sm:$0xff] %v2168
        %2201 = vst [vmem:[%s401 + $0xb8] sm:$0xff] %v2169
        %2202 = vst [vmem:[%s401 + $0xc0] sm:$0xff] %v2170
        %2203 = vst [vmem:[%s401 + $0xc8] sm:$0xff] %v2171
        %2204 = vst [vmem:[%s401 + $0xd0] sm:$0xff] %v2172
        %2205 = vst [vmem:[%s401 + $0xd8] sm:$0xff] %v2173
        %2206 = vst [vmem:[%s401 + $0xe0] sm:$0xff] %v2174
        %2207 = vst [vmem:[%s401 + $0xe8] sm:$0xff] %v2175
        %2208 = vst [vmem:[%s401 + $0xf0] sm:$0xff] %v2176
        %2209 = vst [vmem:[%s401 + $0xf8] sm:$0xff] %v2177
      $region52: #{moe_layer_forward.1} parent=39 // pred_fallthru
        _
      %s2210 = smul.u32 32, %s32
      %p2211 = scmp.lt.s32.totalorder %s2210, 287
      %s2212 = scalar_select %p2211, %s2210, 287
      %s2213 = smul.addr %s2212, 8
      %s2214 = scalar_lea.vmem %s7, %s2213
      // Predicated region
      $region53: #{moe_layer_forward.1} parent=39 // pred_check
        %p2215 = pneg %p200
      $region54: #{moe_layer_forward.1} parent=39 // pred_check_branch
        %2217 = sbr.rel (%p2215) target = $region56
      $region55: #{moe_layer_forward.1} parent=39 // pred_region
        %s2218 = smul.u32 32, %s32
      $region56: #{moe_layer_forward.1} parent=39 // pred_fallthru
        _
    $region40: #{moe_layer_forward.1} parent=5 // pred_fallthru
      _
    %p2219 = scmp.le.s32.totalorder 2, %s23
    // Predicated region
    $region57: #{moe_layer_forward.1} parent=5 // pred_check
      %p2220 = pneg %p2219
    $region58: #{moe_layer_forward.1} parent=5 // pred_check_branch
      %2222 = sbr.rel (%p2220) target = $region60
    $region59: #{moe_layer_forward.1} parent=5 // pred_region
      %s2223 = ssub.s32 %s23, 2
      // Predicated region
      $region61: #{moe_layer_forward.1} parent=59 // pred_check
        %p2224 = pneg %p206
      $region62: #{moe_layer_forward.1} parent=59 // pred_check_branch
        %2226 = sbr.rel (%p2224) target = $region64
      $region63: #{moe_layer_forward.1} parent=59 // pred_region
        %s2227 = smul.u32 32, %s34
        %p2228 = scmp.lt.s32.totalorder %s2227, 287
        %s2229 = scalar_select %p2228, %s2227, 287
        %s2230 = smul.addr %s2229, 8
        %s2231 = scalar_lea.vmem %s7, %s2230
      $region64: #{moe_layer_forward.1} parent=59 // pred_fallthru
        _
    $region60: #{moe_layer_forward.1} parent=5 // pred_fallthru
      _
  $region6: #{moe_layer_forward.1} parent=0 // loop_footer
    %s27 = sadd.s32 1, %s23
  $region7: #{moe_layer_forward.1} parent=0 // loop_footer_branch
    %22 = sbr.rel target = $region3
  $region8: #{moe_layer_forward.1} parent=0 // loop_exit
    _

</llo_original>
